<compile_context>
chip_gen: v5e
topology: v5e:2x2
jax: 0.10.0
libtpu: 0.0.40
codegen_flags: <defaults>
</compile_context>

<pallas_src>
import functools
import math

import jax
import jax.numpy as jnp
from jax.experimental import pallas as pl
from jax.experimental.pallas import tpu as pltpu

_MIN_MOL_LOGSCALE = -250.0
_GRAD_SMOOTH_BETA = 0.6931472  # gradient_smoothing_beta (~ln 2)


def _dml_kernel(*refs, num_classes, num_mixtures, num_channels, seq_len,
                lane_tile, has_mask):
    """Per-(batch, L-tile) block: nll partial sums (1,1,128) + expected (1,C,TL)."""
    if has_mask:
        logits_ref, targets_ref, mask_ref, nllp_ref, expected_ref = refs
    else:
        logits_ref, targets_ref, nllp_ref, expected_ref = refs
        mask_ref = None

    M = num_mixtures
    C = num_channels
    TL = lane_tile
    inv_nc = 1.0 / num_classes
    log_nc_half = math.log(num_classes / 2.0)

    # ---- mixture logits + per-channel means / log-scales -------------------
    logit_probs = logits_ref[0, 0:M, :].astype(jnp.float32)            # (M, TL)
    lp_max = jnp.max(logit_probs, axis=0, keepdims=True)               # (1, TL)

    means_all, ls_all = [], []
    for c in range(C):                       # tiny static loop, fully unrolled
        base = M + 3 * M * c
        means_all.append(logits_ref[0, base:base + M, :].astype(jnp.float32))
        ls_all.append(jnp.maximum(
            logits_ref[0, base + M:base + 2 * M, :].astype(jnp.float32),
            _MIN_MOL_LOGSCALE))

    # One EUP exp over a sublane-stacked slab: every channel's inv_stdv input
    # plus the mixture-softmax exponent -> full (8, TL) vregs for C=1, M=4.
    exp_in = jnp.concatenate(
        [-_GRAD_SMOOTH_BETA * ls for ls in ls_all] + [logit_probs - lp_max],
        axis=0)                                                         # ((C+1)M, TL)
    exp_out = jnp.exp(exp_in)
    sum_exp_lp = jnp.sum(exp_out[C * M:], axis=0, keepdims=True)        # (1, TL)
    log_mix = logit_probs - (lp_max + jnp.log(sum_exp_lp))              # (M, TL)

    log_probs_sum = log_mix
    for c in range(C):
        means = means_all[c]                                            # (M, TL)
        log_scales = ls_all[c]                                          # (M, TL)
        inv_stdv = exp_out[c * M:(c + 1) * M]                           # (M, TL)

        t = targets_ref[0, c:c + 1, :].astype(jnp.float32)              # (1, TL)
        centered = t - means                                            # (M, TL)

        # Stack plus_in/min_in (and mid_in for softplus) so sigmoid/softplus
        # see full 8-sublane vregs instead of half-occupied (M=4) ones.
        pm_in = jnp.concatenate([inv_stdv * (centered + inv_nc),
                                 inv_stdv * (centered - inv_nc)], axis=0)  # (2M, TL)
        mid_in = inv_stdv * centered                                    # (M, TL)

        sig = jax.nn.sigmoid(pm_in)                                     # (2M, TL)
        sp = jax.nn.softplus(jnp.concatenate([pm_in, mid_in], axis=0))  # (3M, TL)

        cdf_delta = sig[:M] - sig[M:]
        log_cdf_plus = pm_in[:M] - sp[:M]
        log_one_minus_cdf_min = -sp[M:2 * M]
        log_pdf_mid = mid_in - log_scales - 2.0 * sp[2 * M:]

        is_min = t == -1.0                      # (1, TL); broadcasts in where
        is_max = t == 1.0
        lp = jnp.where(
            is_min, log_cdf_plus,
            jnp.where(
                is_max, log_one_minus_cdf_min,
                jnp.where(cdf_delta > 1e-5,
                          jnp.log(jnp.maximum(cdf_delta, 1e-12)),
                          log_pdf_mid - log_nc_half)))
        log_probs_sum = log_probs_sum + lp

        # `expected` uses the RAW mixture logits (not the softmax), per spec.
        expected_ref[0, c:c + 1, :] = jnp.sum(
            means * logit_probs, axis=0, keepdims=True).astype(expected_ref.dtype)

    # nll = -logsumexp over the mixture axis.
    mmax = jnp.max(log_probs_sum, axis=0, keepdims=True)                # (1, TL)
    nll = -(mmax + jnp.log(jnp.sum(jnp.exp(log_probs_sum - mmax),
                                   axis=0, keepdims=True)))             # (1, TL)

    if has_mask:
        nll = nll * mask_ref[0].astype(jnp.float32)

    if seq_len % TL != 0:
        # Padded tail tile: zero contributions from lanes past the sequence end
        # (keep this where() last so NaN/inf garbage never leaks into the sum).
        j = pl.program_id(1)
        lane = jax.lax.broadcasted_iota(jnp.int32, (1, TL), 1)
        nll = jnp.where(j * TL + lane < seq_len, nll, 0.0)

    # Fold the tile's nll into 128 per-lane partial sums: a tiny writeback
    # instead of a full (B, L) nll map that the wrapper would have to re-read.
    part = nll[:, 0:128]
    for k in range(1, TL // 128):
        part = part + nll[:, k * 128:(k + 1) * 128]
    nllp_ref[0] = part


def _pick_lane_tile(L, B, cap=8192, target_work=4):
    """Largest 128-multiple lane tile <= cap; shrink (never below 512) only to
    guarantee >= `target_work` grid steps for v7x megacore / pipelining."""
    l128 = ((L + 127) // 128) * 128
    tl = min(cap, l128)
    while tl > 512 and tl % 256 == 0 and B * ((L + tl - 1) // tl) < target_work:
        tl //= 2
    return tl


def discretized_mixture_loss_1dm(logits, target, mask=None, *,
                                 num_classes=256, num_mixtures=4):
    """Pallas TPU implementation of DiscretizedMixtureLoss1dM.forward(logits, target, mask).

    logits: (B, M + 3*C*M, L)   target: (B, L, C) in [-1, 1]   mask: (B, L) or None
    Returns (loss_scalar, expected (B, C, L) in logits.dtype).
    """
    B, L, C = target.shape
    M = num_mixtures
    CH = logits.shape[1]
    assert logits.shape[0] == B and logits.shape[2] == L
    assert CH == M + 3 * C * M, f"expected {M + 3 * C * M} logit channels, got {CH}"

    # torch: target.transpose(1, 2).  For C == 1 this is a free reshape.
    if C == 1:
        targets_bcl = jnp.reshape(target, (B, 1, L))
    else:
        targets_bcl = jnp.swapaxes(target, 1, 2)                     # (B, C, L)

    TL = _pick_lane_tile(L, B)
    NT = (L + TL - 1) // TL
    grid = (B, NT)
    has_mask = mask is not None

    kernel = functools.partial(
        _dml_kernel, num_classes=num_classes, num_mixtures=M, num_channels=C,
        seq_len=L, lane_tile=TL, has_mask=has_mask)

    in_specs = [
        pl.BlockSpec((1, CH, TL), lambda b, j: (b, 0, j)),
        pl.BlockSpec((1, C, TL), lambda b, j: (b, 0, j)),
    ]
    inputs = [logits, targets_bcl]
    if has_mask:
        mask_arr = jnp.asarray(mask)
        if mask_arr.dtype == jnp.bool_:
            mask_arr = mask_arr.astype(jnp.float32)
        inputs.append(jnp.reshape(mask_arr, (B, 1, L)))
        in_specs.append(pl.BlockSpec((1, 1, TL), lambda b, j: (b, 0, j)))

    nll_part, expected = pl.pallas_call(
        kernel,
        out_shape=(
            jax.ShapeDtypeStruct((B, 1, NT * 128), jnp.float32),
            jax.ShapeDtypeStruct((B, C, L), logits.dtype),
        ),
        grid_spec=pltpu.PrefetchScalarGridSpec(
            num_scalar_prefetch=0,
            grid=grid,
            in_specs=in_specs,
            out_specs=(
                pl.BlockSpec((1, 1, 128), lambda b, j: (b, 0, j)),
                pl.BlockSpec((1, C, TL), lambda b, j: (b, 0, j)),
            ),
        ),
        compiler_params=pltpu.CompilerParams(
            dimension_semantics=("parallel", "parallel")),
    )(*inputs)

    total = jnp.sum(nll_part)
    # TODO(synk): the torch source asserts losses.size() == target.size() and
    # calls losses.squeeze(2); that bookkeeping is inconsistent with the (B, L)
    # losses it actually produces, so it is intentionally not reproduced here.
    if has_mask:
        loss = total / jnp.sum(mask)
    else:
        loss = total
    return loss, expected


# ---------------------------------------------------------------------------
# Pure-JAX reference (direct transcription of the torch code) for validation.
# Returns (nll (B, L), expected (B, C, L)).
# ---------------------------------------------------------------------------
def _reference(logits, target, num_classes=256, num_mixtures=4):
    targets = jnp.swapaxes(target, 1, 2)                              # (B, C, L)
    B, C, L = targets.shape
    M = num_mixtures
    t = targets[:, :, None, :]                                        # (B, C, 1, L)
    logit_probs = logits[:, :M, :]                                    # (B, M, L)
    l = logits[:, M:, :].reshape(B, C, 3 * M, L)
    model_means = l[:, :, :M, :]
    log_scales = jnp.maximum(l[:, :, M:2 * M, :], _MIN_MOL_LOGSCALE)
    inv_stdv = jnp.exp(-_GRAD_SMOOTH_BETA * log_scales)
    centered = t - model_means
    plus_in = inv_stdv * (centered + 1.0 / num_classes)
    min_in = inv_stdv * (centered - 1.0 / num_classes)
    cdf_delta = jax.nn.sigmoid(plus_in) - jax.nn.sigmoid(min_in)
    log_cdf_plus = plus_in - jax.nn.softplus(plus_in)
    log_one_minus_cdf_min = -jax.nn.softplus(min_in)
    mid_in = inv_stdv * centered
    log_pdf_mid = mid_in - log_scales - 2.0 * jax.nn.softplus(mid_in)
    bt = jnp.broadcast_to(t, (B, C, M, L))
    log_probs = jnp.where(
        bt == -1, log_cdf_plus,
        jnp.where(
            bt == 1, log_one_minus_cdf_min,
            jnp.where(cdf_delta > 1e-5,
                      jnp.log(jnp.maximum(cdf_delta, 1e-12)),
                      log_pdf_mid - math.log(num_classes / 2.0))))
    log_probs = jnp.sum(log_probs, axis=1) + jax.nn.log_softmax(logit_probs, axis=1)
    nll = -jax.scipy.special.logsumexp(log_probs, axis=1)             # (B, L)
    expected = jnp.sum(model_means * logit_probs[:, None, :, :], axis=2)
    return nll, expected


if __name__ == "__main__":
    NUM_CLASSES, M = 256, 4
    key = jax.random.PRNGKey(0)
    ok = True
    msgs = []

    # ---- Case 1: mask=None, multiple full lane tiles ----------------------
    B, C, L = 2, 1, 2048
    CH = M + 3 * C * M
    k1, k2, key = jax.random.split(key, 3)
    logits1 = jax.random.normal(k1, (B, CH, L), dtype=jnp.float32)
    target1 = jax.random.uniform(k2, (B, L, C), dtype=jnp.float32,
                                 minval=-1.0, maxval=1.0)
    # Exercise the edge branches (targets exactly at the pixel bounds).
    target1 = target1.at[:, 0:4, :].set(-1.0)
    target1 = target1.at[:, 4:8, :].set(1.0)

    loss1, exp1 = discretized_mixture_loss_1dm(
        logits1, target1, num_classes=NUM_CLASSES, num_mixtures=M)
    jax.block_until_ready((loss1, exp1))
    ref_nll1, ref_exp1 = _reference(logits1, target1, num_classes=NUM_CLASSES)
    ref_loss1 = jnp.sum(ref_nll1)
    if not (bool(jnp.allclose(loss1, ref_loss1, rtol=1e-4, atol=1e-3)) and
            bool(jnp.allclose(exp1, ref_exp1, rtol=1e-5, atol=1e-5))):
        ok = False
        msgs.append(f"case1: loss={loss1} ref={ref_loss1} "
                    f"max|dexp|={jnp.max(jnp.abs(exp1 - ref_exp1))}")

    # ---- Case 2: masked loss, L not a multiple of the tile (padded tail) --
    B2, C2, L2 = 2, 1, 1000
    CH2 = M + 3 * C2 * M
    k3, k4, k5, key = jax.random.split(key, 4)
    logits2 = jax.random.normal(k3, (B2, CH2, L2), dtype=jnp.float32)
    target2 = jax.random.uniform(k4, (B2, L2, C2), dtype=jnp.float32,
                                 minval=-1.0, maxval=1.0)
    target2 = target2.at[:, 0:4, :].set(-1.0)
    target2 = target2.at[:, 4:8, :].set(1.0)
    mask2 = (jax.random.uniform(k5, (B2, L2)) > 0.3).astype(jnp.float32)

    loss2, exp2 = discretized_mixture_loss_1dm(
        logits2, target2, mask=mask2, num_classes=NUM_CLASSES, num_mixtures=M)
    jax.block_until_ready((loss2, exp2))
    ref_nll2, ref_exp2 = _reference(logits2, target2, num_classes=NUM_CLASSES)
    ref_loss2 = jnp.sum(ref_nll2 * mask2) / jnp.sum(mask2)
    if not (bool(jnp.allclose(loss2, ref_loss2, rtol=1e-4, atol=1e-3)) and
            bool(jnp.allclose(exp2, ref_exp2, rtol=1e-5, atol=1e-5))):
        ok = False
        msgs.append(f"case2: loss={loss2} ref={ref_loss2} "
                    f"max|dexp|={jnp.max(jnp.abs(exp2 - ref_exp2))}")

    if ok:
        print("KERNEL_OK")
    else:
        print("MISMATCH: " + " | ".join(msgs))
</pallas_src>

<mosaic_0001>
module attributes {stable_mosaic.version = 11 : i64} {
  func.func @_dml_kernel(%arg0: i32, %arg1: i32, %arg2: memref<1x16x1024xf32, #tpu.memory_space<vmem>>, %arg3: memref<1x1x1024xf32, #tpu.memory_space<vmem>>, %arg4: memref<1x1x128xf32, #tpu.memory_space<vmem>>, %arg5: memref<1x1x1024xf32, #tpu.memory_space<vmem>>) attributes {dimension_semantics = [#tpu.dimension_semantics<parallel>, #tpu.dimension_semantics<parallel>], iteration_bounds = array<i64: 2, 2>, scalar_prefetch = 0 : i64, scratch_operands = 0 : i64, tpu.core_type = #tpu.core_type<tc>, window_params = [{transform_indices = @transform_0, window_bounds = array<i64: 1, 16, 1024>}, {transform_indices = @transform_1, window_bounds = array<i64: 1, 1, 1024>}, {transform_indices = @transform_2, window_bounds = array<i64: 1, 1, 128>}, {transform_indices = @transform_3, window_bounds = array<i64: 1, 1, 1024>}]} {
    %c0 = arith.constant 0 : index
    %c0_0 = arith.constant 0 : index
    %c0_1 = arith.constant 0 : index
    %0 = vector.load %arg2[%c0, %c0_0, %c0_1] : memref<1x16x1024xf32, #tpu.memory_space<vmem>>, vector<1x4x1024xf32>
    %1 = vector.shape_cast %0 : vector<1x4x1024xf32> to vector<4x1024xf32>
    %cst = arith.constant dense<0xFF800000> : vector<1024xf32>
    %2 = vector.multi_reduction <maximumf>, %1, %cst [0] : vector<4x1024xf32> to vector<1024xf32>
    %3 = vector.shape_cast %2 : vector<1024xf32> to vector<1x1024xf32>
    %c0_2 = arith.constant 0 : index
    %c4 = arith.constant 4 : index
    %c0_3 = arith.constant 0 : index
    %4 = vector.load %arg2[%c0_2, %c4, %c0_3] : memref<1x16x1024xf32, #tpu.memory_space<vmem>>, vector<1x4x1024xf32>
    %5 = vector.shape_cast %4 : vector<1x4x1024xf32> to vector<4x1024xf32>
    %c0_4 = arith.constant 0 : index
    %c8 = arith.constant 8 : index
    %c0_5 = arith.constant 0 : index
    %6 = vector.load %arg2[%c0_4, %c8, %c0_5] : memref<1x16x1024xf32, #tpu.memory_space<vmem>>, vector<1x4x1024xf32>
    %7 = vector.shape_cast %6 : vector<1x4x1024xf32> to vector<4x1024xf32>
    %cst_6 = arith.constant -2.500000e+02 : f32
    %8 = vector.broadcast %cst_6 : f32 to vector<4x1024xf32>
    %9 = arith.maximumf %7, %8 : vector<4x1024xf32>
    %cst_7 = arith.constant -0.693147182 : f32
    %10 = vector.broadcast %cst_7 : f32 to vector<4x1024xf32>
    %11 = arith.mulf %10, %9 : vector<4x1024xf32>
    %12 = vector.broadcast %3 : vector<1x1024xf32> to vector<4x1024xf32>
    %13 = arith.subf %1, %12 : vector<4x1024xf32>
    %14 = tpu.concatenate %11, %13 in 0 : vector<4x1024xf32>, vector<4x1024xf32> -> vector<8x1024xf32>
    %15 = math.exp %14 : vector<8x1024xf32>
    %16 = vector.extract_strided_slice %15 {offsets = [4, 0], sizes = [4, 1024], strides = [1, 1]} : vector<8x1024xf32> to vector<4x1024xf32>
    %cst_8 = arith.constant dense<0.000000e+00> : vector<1024xf32>
    %17 = vector.multi_reduction <add>, %16, %cst_8 [0] : vector<4x1024xf32> to vector<1024xf32>
    %18 = vector.shape_cast %17 : vector<1024xf32> to vector<1x1024xf32>
    %19 = math.log %18 : vector<1x1024xf32>
    %20 = arith.addf %3, %19 : vector<1x1024xf32>
    %21 = vector.broadcast %20 : vector<1x1024xf32> to vector<4x1024xf32>
    %22 = arith.subf %1, %21 : vector<4x1024xf32>
    %23 = vector.extract_strided_slice %15 {offsets = [0, 0], sizes = [4, 1024], strides = [1, 1]} : vector<8x1024xf32> to vector<4x1024xf32>
    %c0_9 = arith.constant 0 : index
    %c0_10 = arith.constant 0 : index
    %c0_11 = arith.constant 0 : index
    %24 = vector.load %arg3[%c0_9, %c0_10, %c0_11] : memref<1x1x1024xf32, #tpu.memory_space<vmem>>, vector<1x1x1024xf32>
    %25 = vector.shape_cast %24 : vector<1x1x1024xf32> to vector<1x1024xf32>
    %26 = vector.broadcast %25 : vector<1x1024xf32> to vector<4x1024xf32>
    %27 = arith.subf %26, %5 : vector<4x1024xf32>
    %cst_12 = arith.constant 3.906250e-03 : f32
    %28 = vector.broadcast %cst_12 : f32 to vector<4x1024xf32>
    %29 = arith.addf %27, %28 : vector<4x1024xf32>
    %30 = arith.mulf %23, %29 : vector<4x1024xf32>
    %cst_13 = arith.constant 3.906250e-03 : f32
    %31 = vector.broadcast %cst_13 : f32 to vector<4x1024xf32>
    %32 = arith.subf %27, %31 : vector<4x1024xf32>
    %33 = arith.mulf %23, %32 : vector<4x1024xf32>
    %34 = tpu.concatenate %30, %33 in 0 : vector<4x1024xf32>, vector<4x1024xf32> -> vector<8x1024xf32>
    %35 = arith.mulf %23, %27 : vector<4x1024xf32>
    %36 = arith.negf %34 : vector<8x1024xf32>
    %37 = math.exp %36 : vector<8x1024xf32>
    %cst_14 = arith.constant 1.000000e+00 : f32
    %38 = vector.broadcast %cst_14 : f32 to vector<8x1024xf32>
    %39 = arith.addf %38, %37 : vector<8x1024xf32>
    %40 = arith.divf %38, %39 : vector<8x1024xf32>
    %41 = tpu.concatenate %34, %35 in 0 : vector<8x1024xf32>, vector<4x1024xf32> -> vector<12x1024xf32>
    %cst_15 = arith.constant 0.000000e+00 : f32
    %42 = vector.broadcast %cst_15 : f32 to vector<12x1024xf32>
    %43 = arith.maximumf %41, %42 : vector<12x1024xf32>
    %44 = vector.broadcast %cst_15 : f32 to vector<12x1024xf32>
    %45 = arith.subf %41, %44 : vector<12x1024xf32>
    %46 = arith.cmpf one, %45, %45 : vector<12x1024xf32>
    %47 = vector.broadcast %cst_15 : f32 to vector<12x1024xf32>
    %48 = arith.addf %41, %47 : vector<12x1024xf32>
    %49 = math.absf %45 : vector<12x1024xf32>
    %cst_16 = arith.constant 0.000000e+00 : f32
    %50 = vector.broadcast %cst_16 : f32 to vector<12x1024xf32>
    %51 = arith.subf %50, %49 : vector<12x1024xf32>
    %52 = math.exp %51 : vector<12x1024xf32>
    %53 = math.log1p %52 : vector<12x1024xf32>
    %54 = arith.addf %43, %53 : vector<12x1024xf32>
    %55 = arith.select %46, %48, %54 : vector<12x1024xi1>, vector<12x1024xf32>
    %56 = vector.extract_strided_slice %40 {offsets = [0, 0], sizes = [4, 1024], strides = [1, 1]} : vector<8x1024xf32> to vector<4x1024xf32>
    %57 = vector.extract_strided_slice %40 {offsets = [4, 0], sizes = [4, 1024], strides = [1, 1]} : vector<8x1024xf32> to vector<4x1024xf32>
    %58 = arith.subf %56, %57 : vector<4x1024xf32>
    %59 = vector.extract_strided_slice %34 {offsets = [0, 0], sizes = [4, 1024], strides = [1, 1]} : vector<8x1024xf32> to vector<4x1024xf32>
    %60 = vector.extract_strided_slice %55 {offsets = [0, 0], sizes = [4, 1024], strides = [1, 1]} : vector<12x1024xf32> to vector<4x1024xf32>
    %61 = arith.subf %59, %60 : vector<4x1024xf32>
    %62 = vector.extract_strided_slice %55 {offsets = [4, 0], sizes = [4, 1024], strides = [1, 1]} : vector<12x1024xf32> to vector<4x1024xf32>
    %cst_17 = arith.constant 0.000000e+00 : f32
    %63 = vector.broadcast %cst_17 : f32 to vector<4x1024xf32>
    %64 = arith.subf %63, %62 : vector<4x1024xf32>
    %65 = arith.subf %35, %9 : vector<4x1024xf32>
    %66 = vector.extract_strided_slice %55 {offsets = [8, 0], sizes = [4, 1024], strides = [1, 1]} : vector<12x1024xf32> to vector<4x1024xf32>
    %cst_18 = arith.constant 2.000000e+00 : f32
    %67 = vector.broadcast %cst_18 : f32 to vector<4x1024xf32>
    %68 = arith.mulf %67, %66 : vector<4x1024xf32>
    %69 = arith.subf %65, %68 : vector<4x1024xf32>
    %cst_19 = arith.constant -1.000000e+00 : f32
    %70 = vector.broadcast %cst_19 : f32 to vector<1x1024xf32>
    %71 = arith.cmpf oeq, %25, %70 : vector<1x1024xf32>
    %cst_20 = arith.constant 1.000000e+00 : f32
    %72 = vector.broadcast %cst_20 : f32 to vector<1x1024xf32>
    %73 = arith.cmpf oeq, %25, %72 : vector<1x1024xf32>
    %cst_21 = arith.constant 9.99999974E-6 : f32
    %74 = vector.broadcast %cst_21 : f32 to vector<4x1024xf32>
    %75 = arith.cmpf ogt, %58, %74 : vector<4x1024xf32>
    %cst_22 = arith.constant 9.99999996E-13 : f32
    %76 = vector.broadcast %cst_22 : f32 to vector<4x1024xf32>
    %77 = arith.maximumf %58, %76 : vector<4x1024xf32>
    %78 = math.log %77 : vector<4x1024xf32>
    %cst_23 = arith.constant 4.85203028 : f32
    %79 = vector.broadcast %cst_23 : f32 to vector<4x1024xf32>
    %80 = arith.subf %69, %79 : vector<4x1024xf32>
    %81 = arith.select %75, %78, %80 : vector<4x1024xi1>, vector<4x1024xf32>
    %82 = vector.shape_cast %73 : vector<1x1024xi1> to vector<1x1024xi1>
    %83 = vector.broadcast %82 : vector<1x1024xi1> to vector<4x1024xi1>
    %84 = arith.select %83, %64, %81 : vector<4x1024xi1>, vector<4x1024xf32>
    %85 = vector.shape_cast %71 : vector<1x1024xi1> to vector<1x1024xi1>
    %86 = vector.broadcast %85 : vector<1x1024xi1> to vector<4x1024xi1>
    %87 = arith.select %86, %61, %84 : vector<4x1024xi1>, vector<4x1024xf32>
    %88 = arith.addf %22, %87 : vector<4x1024xf32>
    %89 = arith.mulf %5, %1 : vector<4x1024xf32>
    %cst_24 = arith.constant dense<0.000000e+00> : vector<1024xf32>
    %90 = vector.multi_reduction <add>, %89, %cst_24 [0] : vector<4x1024xf32> to vector<1024xf32>
    %91 = vector.shape_cast %90 : vector<1024xf32> to vector<1x1024xf32>
    %c0_25 = arith.constant 0 : index
    %c0_26 = arith.constant 0 : index
    %c0_27 = arith.constant 0 : index
    %92 = vector.load %arg5[%c0_25, %c0_26, %c0_27] : memref<1x1x1024xf32, #tpu.memory_space<vmem>>, vector<1x1x1024xf32>
    %93 = vector.shape_cast %92 : vector<1x1x1024xf32> to vector<1x1024xf32>
    %94 = vector.shape_cast %91 : vector<1x1024xf32> to vector<1x1x1024xf32>
    tpu.vector_store %arg5[%c0_25, %c0_26, %c0_27], %94 {strides = array<i32>} : memref<1x1x1024xf32, #tpu.memory_space<vmem>>, vector<1x1x1024xf32>,
    %cst_28 = arith.constant dense<0xFF800000> : vector<1024xf32>
    %95 = vector.multi_reduction <maximumf>, %88, %cst_28 [0] : vector<4x1024xf32> to vector<1024xf32>
    %96 = vector.shape_cast %95 : vector<1024xf32> to vector<1x1024xf32>
    %97 = vector.broadcast %96 : vector<1x1024xf32> to vector<4x1024xf32>
    %98 = arith.subf %88, %97 : vector<4x1024xf32>
    %99 = math.exp %98 : vector<4x1024xf32>
    %cst_29 = arith.constant dense<0.000000e+00> : vector<1024xf32>
    %100 = vector.multi_reduction <add>, %99, %cst_29 [0] : vector<4x1024xf32> to vector<1024xf32>
    %101 = vector.shape_cast %100 : vector<1024xf32> to vector<1x1024xf32>
    %102 = math.log %101 : vector<1x1024xf32>
    %103 = arith.addf %96, %102 : vector<1x1024xf32>
    %cst_30 = arith.constant 0.000000e+00 : f32
    %104 = vector.broadcast %cst_30 : f32 to vector<1x1024xf32>
    %105 = arith.subf %104, %103 : vector<1x1024xf32>
    %106 = vector.extract_strided_slice %105 {offsets = [0, 0], sizes = [1, 128], strides = [1, 1]} : vector<1x1024xf32> to vector<1x128xf32>
    %107 = vector.extract_strided_slice %105 {offsets = [0, 128], sizes = [1, 128], strides = [1, 1]} : vector<1x1024xf32> to vector<1x128xf32>
    %108 = arith.addf %106, %107 : vector<1x128xf32>
    %109 = vector.extract_strided_slice %105 {offsets = [0, 256], sizes = [1, 128], strides = [1, 1]} : vector<1x1024xf32> to vector<1x128xf32>
    %110 = arith.addf %108, %109 : vector<1x128xf32>
    %111 = vector.extract_strided_slice %105 {offsets = [0, 384], sizes = [1, 128], strides = [1, 1]} : vector<1x1024xf32> to vector<1x128xf32>
    %112 = arith.addf %110, %111 : vector<1x128xf32>
    %113 = vector.extract_strided_slice %105 {offsets = [0, 512], sizes = [1, 128], strides = [1, 1]} : vector<1x1024xf32> to vector<1x128xf32>
    %114 = arith.addf %112, %113 : vector<1x128xf32>
    %115 = vector.extract_strided_slice %105 {offsets = [0, 640], sizes = [1, 128], strides = [1, 1]} : vector<1x1024xf32> to vector<1x128xf32>
    %116 = arith.addf %114, %115 : vector<1x128xf32>
    %117 = vector.extract_strided_slice %105 {offsets = [0, 768], sizes = [1, 128], strides = [1, 1]} : vector<1x1024xf32> to vector<1x128xf32>
    %118 = arith.addf %116, %117 : vector<1x128xf32>
    %119 = vector.extract_strided_slice %105 {offsets = [0, 896], sizes = [1, 128], strides = [1, 1]} : vector<1x1024xf32> to vector<1x128xf32>
    %120 = arith.addf %118, %119 : vector<1x128xf32>
    %c0_31 = arith.constant 0 : index
    %c0_32 = arith.constant 0 : index
    %c0_33 = arith.constant 0 : index
    %121 = vector.load %arg4[%c0_31, %c0_32, %c0_33] : memref<1x1x128xf32, #tpu.memory_space<vmem>>, vector<1x1x128xf32>
    %122 = vector.shape_cast %121 : vector<1x1x128xf32> to vector<1x128xf32>
    %123 = vector.shape_cast %120 : vector<1x128xf32> to vector<1x1x128xf32>
    tpu.vector_store %arg4[%c0_31, %c0_32, %c0_33], %123 {strides = array<i32>} : memref<1x1x128xf32, #tpu.memory_space<vmem>>, vector<1x1x128xf32>,
    return
  }
  func.func @transform_0(%arg0: i32, %arg1: i32) -> (i32, i32, i32) {
    %c0_i32 = arith.constant 0 : i32
    %c0_i32_0 = arith.constant 0 : i32
    return %arg0, %c0_i32, %arg1 : i32, i32, i32
  }
  func.func @transform_1(%arg0: i32, %arg1: i32) -> (i32, i32, i32) {
    %c0_i32 = arith.constant 0 : i32
    %c0_i32_0 = arith.constant 0 : i32
    return %arg0, %c0_i32, %arg1 : i32, i32, i32
  }
  func.func @transform_2(%arg0: i32, %arg1: i32) -> (i32, i32, i32) {
    %c0_i32 = arith.constant 0 : i32
    %c0_i32_0 = arith.constant 0 : i32
    return %arg0, %c0_i32, %arg1 : i32, i32, i32
  }
  func.func @transform_3(%arg0: i32, %arg1: i32) -> (i32, i32, i32) {
    %c0_i32 = arith.constant 0 : i32
    %c0_i32_0 = arith.constant 0 : i32
    return %arg0, %c0_i32, %arg1 : i32, i32, i32
  }
}

</mosaic_0001>

<llo_original>
// kernel: tpu_custom_call.1
$region0: #{tpu_custom_call.1}
  #allocation0 [shape = 'u32[]', space=smem, size = 0x4, offset = 0x4, fixed_abs, tag = 'smem constant byte address 0x4 - core index']
  #allocation1 [shape = 'u32[72,128]{1,0:T(1,128)}', space=vmem, size = 0x9000, scoped, tag = 'internal scratch']
  %s0 = inlined_call_operand.hbm [shape: f32[2,16,2048], index: 0, kind: input, shape index: {}]
  %s1 = inlined_call_operand.hbm [shape: f32[2,1,2048], index: 1, kind: input, shape index: {}]
  %s2 = inlined_call_operand.hbm [shape: f32[2,1,256], index: 2, kind: output, shape index: {0}]
  %s3 = inlined_call_operand.hbm [shape: f32[2,1,2048], index: 3, kind: output, shape index: {1}]
  %4 = xla_tuple %s2, %s3
  %s5 = sld [smem:[#allocation0]]
  $region57: #{tpu_custom_call.1} parent=0
    _
  %s7 = ssub.s32 1, %s5
  %s8 = scalar_select 0, %s7, %s5
  $region1: #{tpu_custom_call.1} parent=0
    #allocation2 [shape = 'u8[131072]{0}', space=vmem, size = 0x20000, scoped, tag = 'input window, operand 0']
    #allocation3 [shape = 's32[2]{0}', space=sflag, size = 0x8, scoped, tag = 'scoped memory for tpu_custom_call.1']
    #allocation4 [shape = 's32[2]{0}', space=sflag, size = 0x8, scoped, tag = 'scoped memory for tpu_custom_call.1']
    #allocation5 [shape = 'u8[8192]{0}', space=vmem, size = 0x2000, scoped, tag = 'input window, operand 1']
    #allocation6 [shape = 's32[2]{0}', space=sflag, size = 0x8, scoped, tag = 'scoped memory for tpu_custom_call.1']
    #allocation7 [shape = 'u8[1024]{0}', space=vmem, size = 0x400, scoped, tag = 'output window, operand 0']
    #allocation8 [shape = 'u8[8192]{0}', space=vmem, size = 0x2000, scoped, tag = 'output window, operand 1']
    #allocation9 [shape = 's32[2]{0}', space=sflag, size = 0x8, scoped, tag = 'scoped memory for tpu_custom_call.1']
    %9 = vsyncpa [#allocation3], 0
    %s10 = scalar_lea.sflag [#allocation3], 1
    %11 = vsyncpa %s10, 0
    %12 = vsyncpa [#allocation6], 0
    %s13 = scalar_lea.sflag [#allocation6], 1
    %14 = vsyncpa %s13, 0
    %15 = vsyncpa [#allocation4], 0
    %s16 = scalar_lea.sflag [#allocation4], 1
    %17 = vsyncpa %s16, 0
    %18 = vsyncpa [#allocation9], 0
    %s19 = scalar_lea.sflag [#allocation9], 1
    %20 = vsyncpa %s19, 0
    loop: start=0, step=1, limit=6
    $region2: #{tpu_custom_call.1} parent=1 // loop_pre_header
      _
    $region3: #{tpu_custom_call.1} parent=1 // loop_header
      %s22 = sphi 0, %s26
      %p23 = scmp.ge.s32.totalorder %s22, 6
      %s29 = sphi 0, %s41
      %s30 = sphi 0, %s37
      %s31 = sphi 0, %s29
      %s32 = sphi 0, %s30
      %s33 = sphi 0, %s31
      %s34 = sphi 0, %s32
      %s46 = sphi 0, %s48
      %s49 = sphi 0, %s46
      %s50 = sphi 0, %s49
      %s66 = sphi 0, %s50
      %s74 = sphi 0, %s76
      %s77 = sphi 0, %s74
      %s78 = sphi 0, %s77
      %s94 = sphi 0, %s78
      %s102 = sphi 0, %s104
      %s105 = sphi 0, %s102
      %s106 = sphi 0, %s105
      %s122 = sphi 0, %s106
      %s130 = sphi 0, %s132
      %s133 = sphi 0, %s130
      %s134 = sphi 0, %s133
      %s150 = sphi 0, %s134
    $region4: #{tpu_custom_call.1} parent=1 // loop_header_branch
      %25 = sbr.rel (%p23) target = $region8
    $region5: #{tpu_custom_call.1} parent=1 // loop_body
      %s27 = ssub.s32 %s22, 1
      %s28 = ssub.s32 %s22, 2
      %s35 = sadd.s32 1, %s30
      %p36 = scmp.ge.s32.totalorder %s35, 2
      %s37 = scalar_select %p36, 0, %s35
      %s38 = sadd.s32 1, %s29
      %s39 = scalar_select %p36, %s38, %s29
      %p40 = scmp.ge.s32.totalorder %s39, 2
      %s41 = scalar_select %p40, 0, %s39
      %s42 = ssub.s32 %s29, %s41
      %s43 = ssub.s32 %s30, %s37
      %s44 = sor.u32 %s42, %s43
      %p45 = scmp.eq.s32.totalorder %s44, 0
      %s47 = sadd.s32 %s46, 1
      %s48 = scalar_select %p45, %s46, %s47
      %p51 = pneg %p45
      %p52 = scmp.eq.s32.totalorder %s22, 3
      %p53 = por %p51, %p52
      %p54 = scmp.ne.s32.totalorder %s46, %s49
      %p55 = scmp.eq.s32.totalorder %s22, 0
      %p56 = por %p54, %p55
      %p57 = scmp.ne.s32.totalorder %s46, %s49
      %p58 = scmp.eq.s32.totalorder %s27, 3
      %p59 = por %p57, %p58
      %p60 = scmp.ne.s32.totalorder %s49, %s50
      %p61 = scmp.eq.s32.totalorder %s27, 0
      %p62 = por %p60, %p61
      %p63 = scmp.ne.s32.totalorder %s49, %s50
      %p64 = scmp.eq.s32.totalorder %s28, 3
      %p65 = por %p63, %p64
      %p67 = scmp.ne.s32.totalorder %s50, %s66
      %p68 = scmp.eq.s32.totalorder %s28, 0
      %p69 = por %p67, %p68
      %s70 = ssub.s32 %s29, %s41
      %s71 = ssub.s32 %s30, %s37
      %s72 = sor.u32 %s70, %s71
      %p73 = scmp.eq.s32.totalorder %s72, 0
      %s75 = sadd.s32 %s74, 1
      %s76 = scalar_select %p73, %s74, %s75
      %p79 = pneg %p73
      %p80 = scmp.eq.s32.totalorder %s22, 3
      %p81 = por %p79, %p80
      %p82 = scmp.ne.s32.totalorder %s74, %s77
      %p83 = scmp.eq.s32.totalorder %s22, 0
      %p84 = por %p82, %p83
      %p85 = scmp.ne.s32.totalorder %s74, %s77
      %p86 = scmp.eq.s32.totalorder %s27, 3
      %p87 = por %p85, %p86
      %p88 = scmp.ne.s32.totalorder %s77, %s78
      %p89 = scmp.eq.s32.totalorder %s27, 0
      %p90 = por %p88, %p89
      %p91 = scmp.ne.s32.totalorder %s77, %s78
      %p92 = scmp.eq.s32.totalorder %s28, 3
      %p93 = por %p91, %p92
      %p95 = scmp.ne.s32.totalorder %s78, %s94
      %p96 = scmp.eq.s32.totalorder %s28, 0
      %p97 = por %p95, %p96
      %s98 = ssub.s32 %s29, %s41
      %s99 = ssub.s32 %s30, %s37
      %s100 = sor.u32 %s98, %s99
      %p101 = scmp.eq.s32.totalorder %s100, 0
      %s103 = sadd.s32 %s102, 1
      %s104 = scalar_select %p101, %s102, %s103
      %p107 = pneg %p101
      %p108 = scmp.eq.s32.totalorder %s22, 3
      %p109 = por %p107, %p108
      %p110 = scmp.ne.s32.totalorder %s102, %s105
      %p111 = scmp.eq.s32.totalorder %s22, 0
      %p112 = por %p110, %p111
      %p113 = scmp.ne.s32.totalorder %s102, %s105
      %p114 = scmp.eq.s32.totalorder %s27, 3
      %p115 = por %p113, %p114
      %p116 = scmp.ne.s32.totalorder %s105, %s106
      %p117 = scmp.eq.s32.totalorder %s27, 0
      %p118 = por %p116, %p117
      %p119 = scmp.ne.s32.totalorder %s105, %s106
      %p120 = scmp.eq.s32.totalorder %s28, 3
      %p121 = por %p119, %p120
      %p123 = scmp.ne.s32.totalorder %s106, %s122
      %p124 = scmp.eq.s32.totalorder %s28, 0
      %p125 = por %p123, %p124
      %s126 = ssub.s32 %s29, %s41
      %s127 = ssub.s32 %s30, %s37
      %s128 = sor.u32 %s126, %s127
      %p129 = scmp.eq.s32.totalorder %s128, 0
      %s131 = sadd.s32 %s130, 1
      %s132 = scalar_select %p129, %s130, %s131
      %p135 = pneg %p129
      %p136 = scmp.eq.s32.totalorder %s22, 3
      %p137 = por %p135, %p136
      %p138 = scmp.ne.s32.totalorder %s130, %s133
      %p139 = scmp.eq.s32.totalorder %s22, 0
      %p140 = por %p138, %p139
      %p141 = scmp.ne.s32.totalorder %s130, %s133
      %p142 = scmp.eq.s32.totalorder %s27, 3
      %p143 = por %p141, %p142
      %p144 = scmp.ne.s32.totalorder %s133, %s134
      %p145 = scmp.eq.s32.totalorder %s27, 0
      %p146 = por %p144, %p145
      %p147 = scmp.ne.s32.totalorder %s133, %s134
      %p148 = scmp.eq.s32.totalorder %s28, 3
      %p149 = por %p147, %p148
      %p151 = scmp.ne.s32.totalorder %s134, %s150
      %p152 = scmp.eq.s32.totalorder %s28, 0
      %p153 = por %p151, %p152
      %p154 = scmp.le.s32.totalorder 1, %s22
      %p155 = scmp.lt.s32.totalorder %s22, 5
      %p156 = pnand %p154, %p155
      %p157 = pneg %p156
      // Predicated region
      $region9: #{tpu_custom_call.1} parent=5 // pred_check
        _
      $region10: #{tpu_custom_call.1} parent=5 // pred_check_branch
        %159 = sbr.rel (%p156) target = $region12
      $region11: #{tpu_custom_call.1} parent=5 // pred_region
        %s160 = ssub.s32 %s22, 1
      $region12: #{tpu_custom_call.1} parent=5 // pred_fallthru
        _
      %p161 = scmp.lt.s32.totalorder %s22, 4
      // Predicated region
      $region13: #{tpu_custom_call.1} parent=5 // pred_check
        %p162 = pneg %p161
      $region14: #{tpu_custom_call.1} parent=5 // pred_check_branch
        %164 = sbr.rel (%p162) target = $region16
      $region15: #{tpu_custom_call.1} parent=5 // pred_region
        // Predicated region
        $region17: #{tpu_custom_call.1} parent=15 // pred_check
          %p165 = pneg %p56
        $region18: #{tpu_custom_call.1} parent=15 // pred_check_branch
          %167 = sbr.rel (%p165) target = $region20
        $region19: #{tpu_custom_call.1} parent=15 // pred_region
          %s168 = sand.u32 %s46, 1
          %s169 = scalar_lea.sflag [#allocation3], %s168
          %s170 = sand.u32 %s46, 1
          %s171 = smul.addr %s170, 128
          %s172 = scalar_lea.vmem [#allocation2], %s171
          %s173 = smul.u32 8, %s30
          %175 = vsyncadd %s169, 0
          %s176 = smul.addr %s29, 32
          %s177 = sadd.s32 %s173, %s176
          %s178 = smul.addr %s177, 8
          %s179 = scalar_lea.hbm %s0, %s178
          %s180 = sshll.u32 %s179, 4
          %s181 = int_to_ptr.hbm [resolvable:$true] %s180
          %s182 = sshll.u32 %s172, 4
          %s183 = int_to_ptr.vmem [resolvable:$true] %s182
          %188 = dma.hbm_to_vmem [thread:$0]  %s181, 2048, %s183, %s169, 2048, 1024, 64
        $region20: #{tpu_custom_call.1} parent=15 // pred_fallthru
          _
        // Predicated region
        $region21: #{tpu_custom_call.1} parent=15 // pred_check
          %p189 = pneg %p84
        $region22: #{tpu_custom_call.1} parent=15 // pred_check_branch
          %191 = sbr.rel (%p189) target = $region24
        $region23: #{tpu_custom_call.1} parent=15 // pred_region
          %s192 = sand.u32 %s74, 1
          %s193 = scalar_lea.sflag [#allocation6], %s192
          %s194 = sand.u32 %s74, 1
          %s195 = smul.addr %s194, 8
          %s196 = scalar_lea.vmem [#allocation5], %s195
          %s197 = smul.u32 8, %s30
          %199 = vsyncadd %s193, 0
          %s200 = smul.addr %s29, 16
          %s201 = sadd.s32 %s197, %s200
          %s202 = scalar_lea.hbm %s1, %s201
          %s204 = sshll.u32 %s202, 4
          %s205 = int_to_ptr.hbm [resolvable:$true] %s204
          %s206 = sshll.u32 %s196, 4
          %s207 = int_to_ptr.vmem [resolvable:$true] %s206
          %209 = dma.hbm_to_vmem [thread:$0]  %s205, 128, %s207, %s193
        $region24: #{tpu_custom_call.1} parent=15 // pred_fallthru
          _
      $region16: #{tpu_custom_call.1} parent=5 // pred_fallthru
        _
      %p210 = scmp.le.s32.totalorder 1, %s22
      %p211 = scmp.lt.s32.totalorder %s22, 5
      %p212 = pnand %p210, %p211
      %p213 = pneg %p212
      // Predicated region
      $region25: #{tpu_custom_call.1} parent=5 // pred_check
        _
      $region26: #{tpu_custom_call.1} parent=5 // pred_check_branch
        %215 = sbr.rel (%p212) target = $region28
      $region27: #{tpu_custom_call.1} parent=5 // pred_region
        %s216 = ssub.s32 %s22, 1
        %s217 = sand.u32 %s49, 1
        %s218 = scalar_lea.sflag [#allocation3], %s217
        %s219 = sand.u32 %s49, 1
        %s220 = smul.addr %s219, 128
        %s221 = scalar_lea.vmem [#allocation2], %s220
        // Predicated region
        $region29: #{tpu_custom_call.1} parent=27 // pred_check
          %p222 = pneg %p62
        $region30: #{tpu_custom_call.1} parent=27 // pred_check_branch
          %224 = sbr.rel (%p222) target = $region32
        $region31: #{tpu_custom_call.1} parent=27 // pred_region
          %226 = dma.done %s218, 2048
        $region32: #{tpu_custom_call.1} parent=27 // pred_fallthru
          _
        %s227 = sand.u32 %s77, 1
        %s228 = scalar_lea.sflag [#allocation6], %s227
        %s229 = sand.u32 %s77, 1
        %s230 = smul.addr %s229, 8
        %s231 = scalar_lea.vmem [#allocation5], %s230
        // Predicated region
        $region33: #{tpu_custom_call.1} parent=27 // pred_check
          %p232 = pneg %p90
        $region34: #{tpu_custom_call.1} parent=27 // pred_check_branch
          %234 = sbr.rel (%p232) target = $region36
        $region35: #{tpu_custom_call.1} parent=27 // pred_region
          %236 = dma.done %s228, 128
        $region36: #{tpu_custom_call.1} parent=27 // pred_fallthru
          _
        %s237 = sand.u32 %s49, 1
        %s238 = scalar_lea.sflag [#allocation3], %s237
        %s239 = sand.u32 %s49, 1
        %s240 = smul.addr %s239, 128
        %s241 = scalar_lea.vmem [#allocation2], %s240
        %p242 = pneg %p62
        %p243 = pneg %p59
        %s244 = sand.u32 %s77, 1
        %s245 = scalar_lea.sflag [#allocation6], %s244
        %s246 = sand.u32 %s77, 1
        %s247 = smul.addr %s246, 8
        %s248 = scalar_lea.vmem [#allocation5], %s247
        %p249 = pneg %p90
        %p250 = pneg %p87
        %p251 = pneg %p118
        %p252 = pneg %p115
        %s253 = sand.u32 %s105, 1
        %s254 = scalar_lea.sflag [#allocation4], %s253
        %s255 = sand.u32 %s105, 1
        %s256 = scalar_lea.vmem [#allocation7], %s255
        %p257 = pneg %p146
        %p258 = pneg %p143
        %s259 = sand.u32 %s133, 1
        %s260 = scalar_lea.sflag [#allocation9], %s259
        %s261 = sand.u32 %s133, 1
        %s262 = smul.addr %s261, 8
        %s263 = scalar_lea.vmem [#allocation8], %s262
        %s264 = smul.u32 8, %s32
        %s265 = smul.u32 8, %s32
        %s266 = smul.u32 8, %s32
        %v267 = vld [vmem:[%s221] sm:$0xf]
        %v268 = vld [vmem:[%s221 + $0x8] sm:$0xf]
        %v269 = vld [vmem:[%s221 + $0x10] sm:$0xf]
        %v270 = vld [vmem:[%s221 + $0x18] sm:$0xf]
        %v271 = vld [vmem:[%s221 + $0x20] sm:$0xf]
        %v272 = vld [vmem:[%s221 + $0x28] sm:$0xf]
        %v273 = vld [vmem:[%s221 + $0x30] sm:$0xf]
        %v274 = vld [vmem:[%s221 + $0x38] sm:$0xf]
        %vm275 = vcmask 1043456
        %v276 = vsel %vm275, %v267, -inf
        %v277 = vrot.slane %v276, 4
        %v278 = vmax.f32 %v276, %v277
        %v279 = vrot.slane %v278, 2
        %v280 = vmax.f32 %v278, %v279
        %v281 = vrot.slane %v280, 1
        %v282 = vmax.f32 %v280, %v281
        %v283 = vsel %vm275, %v268, -inf
        %v284 = vrot.slane %v283, 4
        %v285 = vmax.f32 %v283, %v284
        %v286 = vrot.slane %v285, 2
        %v287 = vmax.f32 %v285, %v286
        %v288 = vrot.slane %v287, 1
        %v289 = vmax.f32 %v287, %v288
        %v290 = vsel %vm275, %v269, -inf
        %v291 = vrot.slane %v290, 4
        %v292 = vmax.f32 %v290, %v291
        %v293 = vrot.slane %v292, 2
        %v294 = vmax.f32 %v292, %v293
        %v295 = vrot.slane %v294, 1
        %v296 = vmax.f32 %v294, %v295
        %v297 = vsel %vm275, %v270, -inf
        %v298 = vrot.slane %v297, 4
        %v299 = vmax.f32 %v297, %v298
        %v300 = vrot.slane %v299, 2
        %v301 = vmax.f32 %v299, %v300
        %v302 = vrot.slane %v301, 1
        %v303 = vmax.f32 %v301, %v302
        %v304 = vsel %vm275, %v271, -inf
        %v305 = vrot.slane %v304, 4
        %v306 = vmax.f32 %v304, %v305
        %v307 = vrot.slane %v306, 2
        %v308 = vmax.f32 %v306, %v307
        %v309 = vrot.slane %v308, 1
        %v310 = vmax.f32 %v308, %v309
        %v311 = vsel %vm275, %v272, -inf
        %v312 = vrot.slane %v311, 4
        %v313 = vmax.f32 %v311, %v312
        %v314 = vrot.slane %v313, 2
        %v315 = vmax.f32 %v313, %v314
        %v316 = vrot.slane %v315, 1
        %v317 = vmax.f32 %v315, %v316
        %v318 = vsel %vm275, %v273, -inf
        %v319 = vrot.slane %v318, 4
        %v320 = vmax.f32 %v318, %v319
        %v321 = vrot.slane %v320, 2
        %v322 = vmax.f32 %v320, %v321
        %v323 = vrot.slane %v322, 1
        %v324 = vmax.f32 %v322, %v323
        %v325 = vsel %vm275, %v274, -inf
        %v326 = vrot.slane %v325, 4
        %v327 = vmax.f32 %v325, %v326
        %v328 = vrot.slane %v327, 2
        %v329 = vmax.f32 %v327, %v328
        %v330 = vrot.slane %v329, 1
        %v331 = vmax.f32 %v329, %v330
        %v332 = vld [vmem:[%s221] sm:$0xf0]
        %v333 = vld [vmem:[%s221 + $0x8] sm:$0xf0]
        %v334 = vld [vmem:[%s221 + $0x10] sm:$0xf0]
        %v335 = vld [vmem:[%s221 + $0x18] sm:$0xf0]
        %v336 = vld [vmem:[%s221 + $0x20] sm:$0xf0]
        %v337 = vld [vmem:[%s221 + $0x28] sm:$0xf0]
        %v338 = vld [vmem:[%s221 + $0x30] sm:$0xf0]
        %v339 = vld [vmem:[%s221 + $0x38] sm:$0xf0]
        %v340 = vld [vmem:[%s221 + $0x40] sm:$0xf]
        %v341 = vld [vmem:[%s221 + $0x48] sm:$0xf]
        %v342 = vld [vmem:[%s221 + $0x50] sm:$0xf]
        %v343 = vld [vmem:[%s221 + $0x58] sm:$0xf]
        %v344 = vld [vmem:[%s221 + $0x60] sm:$0xf]
        %v345 = vld [vmem:[%s221 + $0x68] sm:$0xf]
        %v346 = vld [vmem:[%s221 + $0x70] sm:$0xf]
        %v347 = vld [vmem:[%s221 + $0x78] sm:$0xf]
        %v348 = vmax.f32 %v340, -250.0
        %v349 = vmax.f32 %v341, -250.0
        %v350 = vmax.f32 %v342, -250.0
        %v351 = vmax.f32 %v343, -250.0
        %v352 = vmax.f32 %v344, -250.0
        %v353 = vmax.f32 %v345, -250.0
        %v354 = vmax.f32 %v346, -250.0
        %v355 = vmax.f32 %v347, -250.0
        %v356 = vmul.f32 %v348, -0.6931472
        %v357 = vmul.f32 %v349, -0.6931472
        %v358 = vmul.f32 %v350, -0.6931472
        %v359 = vmul.f32 %v351, -0.6931472
        %v360 = vmul.f32 %v352, -0.6931472
        %v361 = vmul.f32 %v353, -0.6931472
        %v362 = vmul.f32 %v354, -0.6931472
        %v363 = vmul.f32 %v355, -0.6931472
        %v364 = vsub.f32 %v267, %v282
        %v365 = vsub.f32 %v268, %v289
        %v366 = vsub.f32 %v269, %v296
        %v367 = vsub.f32 %v270, %v303
        %v368 = vsub.f32 %v271, %v310
        %v369 = vsub.f32 %v272, %v317
        %v370 = vsub.f32 %v273, %v324
        %v371 = vsub.f32 %v274, %v331
        %v380 = vrot.slane %v364, 4
        %v381 = vrot.slane %v365, 4
        %v382 = vrot.slane %v366, 4
        %v383 = vrot.slane %v367, 4
        %v384 = vrot.slane %v368, 4
        %v385 = vrot.slane %v369, 4
        %v386 = vrot.slane %v370, 4
        %v387 = vrot.slane %v371, 4
        %v396 = vsel %vm275, %v356, %v380
        %v397 = vsel %vm275, %v357, %v381
        %v398 = vsel %vm275, %v358, %v382
        %v399 = vsel %vm275, %v359, %v383
        %v400 = vsel %vm275, %v360, %v384
        %v401 = vsel %vm275, %v361, %v385
        %v402 = vsel %vm275, %v362, %v386
        %v403 = vsel %vm275, %v363, %v387
        %v404 = vmul.f32 %v396, 1.442695
        %v405 = vpow.pop %v404
        %v406 = vmul.f32 %v397, 1.442695
        %v407 = vpow.pop %v406
        %v408 = vmul.f32 %v398, 1.442695
        %v409 = vpow.pop %v408
        %v410 = vmul.f32 %v399, 1.442695
        %v411 = vpow.pop %v410
        %v412 = vmul.f32 %v400, 1.442695
        %v413 = vpow.pop %v412
        %v414 = vmul.f32 %v401, 1.442695
        %v415 = vpow.pop %v414
        %v416 = vmul.f32 %v402, 1.442695
        %v417 = vpow.pop %v416
        %v418 = vmul.f32 %v403, 1.442695
        %v419 = vpow.pop %v418
        %v428 = vrot.slane %v405, 4
        %v429 = vrot.slane %v407, 4
        %v430 = vrot.slane %v409, 4
        %v431 = vrot.slane %v411, 4
        %v432 = vrot.slane %v413, 4
        %v433 = vrot.slane %v415, 4
        %v434 = vrot.slane %v417, 4
        %v435 = vrot.slane %v419, 4
        %v444 = vsel %vm275, %v428, 0.0
        %v445 = vrot.slane %v444, 4
        %v446 = vadd.f32 %v444, %v445
        %v447 = vrot.slane %v446, 2
        %v448 = vadd.f32 %v446, %v447
        %v449 = vrot.slane %v448, 1
        %v450 = vadd.f32 %v448, %v449
        %v451 = vsel %vm275, %v429, 0.0
        %v452 = vrot.slane %v451, 4
        %v453 = vadd.f32 %v451, %v452
        %v454 = vrot.slane %v453, 2
        %v455 = vadd.f32 %v453, %v454
        %v456 = vrot.slane %v455, 1
        %v457 = vadd.f32 %v455, %v456
        %v458 = vsel %vm275, %v430, 0.0
        %v459 = vrot.slane %v458, 4
        %v460 = vadd.f32 %v458, %v459
        %v461 = vrot.slane %v460, 2
        %v462 = vadd.f32 %v460, %v461
        %v463 = vrot.slane %v462, 1
        %v464 = vadd.f32 %v462, %v463
        %v465 = vsel %vm275, %v431, 0.0
        %v466 = vrot.slane %v465, 4
        %v467 = vadd.f32 %v465, %v466
        %v468 = vrot.slane %v467, 2
        %v469 = vadd.f32 %v467, %v468
        %v470 = vrot.slane %v469, 1
        %v471 = vadd.f32 %v469, %v470
        %v472 = vsel %vm275, %v432, 0.0
        %v473 = vrot.slane %v472, 4
        %v474 = vadd.f32 %v472, %v473
        %v475 = vrot.slane %v474, 2
        %v476 = vadd.f32 %v474, %v475
        %v477 = vrot.slane %v476, 1
        %v478 = vadd.f32 %v476, %v477
        %v479 = vsel %vm275, %v433, 0.0
        %v480 = vrot.slane %v479, 4
        %v481 = vadd.f32 %v479, %v480
        %v482 = vrot.slane %v481, 2
        %v483 = vadd.f32 %v481, %v482
        %v484 = vrot.slane %v483, 1
        %v485 = vadd.f32 %v483, %v484
        %v486 = vsel %vm275, %v434, 0.0
        %v487 = vrot.slane %v486, 4
        %v488 = vadd.f32 %v486, %v487
        %v489 = vrot.slane %v488, 2
        %v490 = vadd.f32 %v488, %v489
        %v491 = vrot.slane %v490, 1
        %v492 = vadd.f32 %v490, %v491
        %v493 = vsel %vm275, %v435, 0.0
        %v494 = vrot.slane %v493, 4
        %v495 = vadd.f32 %v493, %v494
        %v496 = vrot.slane %v495, 2
        %v497 = vadd.f32 %v495, %v496
        %v498 = vrot.slane %v497, 1
        %v499 = vadd.f32 %v497, %v498
        %v500 = vlog2.pop %v450
        %v501 = vmul.f32 %v500, 0.6931472
        %v502 = vlog2.pop %v457
        %v503 = vmul.f32 %v502, 0.6931472
        %v504 = vlog2.pop %v464
        %v505 = vmul.f32 %v504, 0.6931472
        %v506 = vlog2.pop %v471
        %v507 = vmul.f32 %v506, 0.6931472
        %v508 = vlog2.pop %v478
        %v509 = vmul.f32 %v508, 0.6931472
        %v510 = vlog2.pop %v485
        %v511 = vmul.f32 %v510, 0.6931472
        %v512 = vlog2.pop %v492
        %v513 = vmul.f32 %v512, 0.6931472
        %v514 = vlog2.pop %v499
        %v515 = vmul.f32 %v514, 0.6931472
        %v516 = vadd.f32 %v282, %v501
        %v517 = vadd.f32 %v289, %v503
        %v518 = vadd.f32 %v296, %v505
        %v519 = vadd.f32 %v303, %v507
        %v520 = vadd.f32 %v310, %v509
        %v521 = vadd.f32 %v317, %v511
        %v522 = vadd.f32 %v324, %v513
        %v523 = vadd.f32 %v331, %v515
        %v524 = vsub.f32 %v267, %v516
        %v525 = vsub.f32 %v268, %v517
        %v526 = vsub.f32 %v269, %v518
        %v527 = vsub.f32 %v270, %v519
        %v528 = vsub.f32 %v271, %v520
        %v529 = vsub.f32 %v272, %v521
        %v530 = vsub.f32 %v273, %v522
        %v531 = vsub.f32 %v274, %v523
        %v532 = vld [vmem:[%s231] sm:$0xff]
        %v534 = vperm.slane %v532, 0
        %v535 = vperm.slane %v532, 1
        %v536 = vperm.slane %v532, 2
        %v537 = vperm.slane %v532, 3
        %v538 = vperm.slane %v532, 4
        %v539 = vperm.slane %v532, 5
        %v540 = vperm.slane %v532, 6
        %v541 = vperm.slane %v532, 7
        %v550 = vsub.f32 %v534, %v332
        %v551 = vsub.f32 %v535, %v333
        %v552 = vsub.f32 %v536, %v334
        %v553 = vsub.f32 %v537, %v335
        %v554 = vsub.f32 %v538, %v336
        %v555 = vsub.f32 %v539, %v337
        %v556 = vsub.f32 %v540, %v338
        %v557 = vsub.f32 %v541, %v339
        %v558 = vadd.f32 %v550, 0.00390625
        %v559 = vadd.f32 %v551, 0.00390625
        %v560 = vadd.f32 %v552, 0.00390625
        %v561 = vadd.f32 %v553, 0.00390625
        %v562 = vadd.f32 %v554, 0.00390625
        %v563 = vadd.f32 %v555, 0.00390625
        %v564 = vadd.f32 %v556, 0.00390625
        %v565 = vadd.f32 %v557, 0.00390625
        %v574 = vrot.slane %v558, 4
        %v575 = vrot.slane %v559, 4
        %v576 = vrot.slane %v560, 4
        %v577 = vrot.slane %v561, 4
        %v578 = vrot.slane %v562, 4
        %v579 = vrot.slane %v563, 4
        %v580 = vrot.slane %v564, 4
        %v581 = vrot.slane %v565, 4
        %v590 = vmul.f32 %v405, %v574
        %v591 = vmul.f32 %v407, %v575
        %v592 = vmul.f32 %v409, %v576
        %v593 = vmul.f32 %v411, %v577
        %v594 = vmul.f32 %v413, %v578
        %v595 = vmul.f32 %v415, %v579
        %v596 = vmul.f32 %v417, %v580
        %v597 = vmul.f32 %v419, %v581
        %v598 = vsub.f32 %v550, 0.00390625
        %v599 = vsub.f32 %v551, 0.00390625
        %v600 = vsub.f32 %v552, 0.00390625
        %v601 = vsub.f32 %v553, 0.00390625
        %v602 = vsub.f32 %v554, 0.00390625
        %v603 = vsub.f32 %v555, 0.00390625
        %v604 = vsub.f32 %v556, 0.00390625
        %v605 = vsub.f32 %v557, 0.00390625
        %v614 = vrot.slane %v598, 4
        %v615 = vrot.slane %v599, 4
        %v616 = vrot.slane %v600, 4
        %v617 = vrot.slane %v601, 4
        %v618 = vrot.slane %v602, 4
        %v619 = vrot.slane %v603, 4
        %v620 = vrot.slane %v604, 4
        %v621 = vrot.slane %v605, 4
        %v630 = vmul.f32 %v405, %v614
        %v631 = vmul.f32 %v407, %v615
        %v632 = vmul.f32 %v409, %v616
        %v633 = vmul.f32 %v411, %v617
        %v634 = vmul.f32 %v413, %v618
        %v635 = vmul.f32 %v415, %v619
        %v636 = vmul.f32 %v417, %v620
        %v637 = vmul.f32 %v419, %v621
        %v646 = vrot.slane %v630, 4
        %v647 = vrot.slane %v631, 4
        %v648 = vrot.slane %v632, 4
        %v649 = vrot.slane %v633, 4
        %v650 = vrot.slane %v634, 4
        %v651 = vrot.slane %v635, 4
        %v652 = vrot.slane %v636, 4
        %v653 = vrot.slane %v637, 4
        %v662 = vsel %vm275, %v590, %v646
        %v663 = vsel %vm275, %v591, %v647
        %v664 = vsel %vm275, %v592, %v648
        %v665 = vsel %vm275, %v593, %v649
        %v666 = vsel %vm275, %v594, %v650
        %v667 = vsel %vm275, %v595, %v651
        %v668 = vsel %vm275, %v596, %v652
        %v669 = vsel %vm275, %v597, %v653
        %v678 = vrot.slane %v550, 4
        %v679 = vrot.slane %v551, 4
        %v680 = vrot.slane %v552, 4
        %v681 = vrot.slane %v553, 4
        %v682 = vrot.slane %v554, 4
        %v683 = vrot.slane %v555, 4
        %v684 = vrot.slane %v556, 4
        %v685 = vrot.slane %v557, 4
        %v694 = vmul.f32 %v405, %v678
        %v695 = vmul.f32 %v407, %v679
        %v696 = vmul.f32 %v409, %v680
        %v697 = vmul.f32 %v411, %v681
        %v698 = vmul.f32 %v413, %v682
        %v699 = vmul.f32 %v415, %v683
        %v700 = vmul.f32 %v417, %v684
        %v701 = vmul.f32 %v419, %v685
        %v702 = vxor.u32 %v662, 2147483648
        %v703 = vxor.u32 %v663, 2147483648
        %v704 = vxor.u32 %v664, 2147483648
        %v705 = vxor.u32 %v665, 2147483648
        %v706 = vxor.u32 %v666, 2147483648
        %v707 = vxor.u32 %v667, 2147483648
        %v708 = vxor.u32 %v668, 2147483648
        %v709 = vxor.u32 %v669, 2147483648
        %v710 = vmul.f32 %v702, 1.442695
        %v711 = vpow.pop %v710
        %v712 = vmul.f32 %v703, 1.442695
        %v713 = vpow.pop %v712
        %v714 = vmul.f32 %v704, 1.442695
        %v715 = vpow.pop %v714
        %v716 = vmul.f32 %v705, 1.442695
        %v717 = vpow.pop %v716
        %v718 = vmul.f32 %v706, 1.442695
        %v719 = vpow.pop %v718
        %v720 = vmul.f32 %v707, 1.442695
        %v721 = vpow.pop %v720
        %v722 = vmul.f32 %v708, 1.442695
        %v723 = vpow.pop %v722
        %v724 = vmul.f32 %v709, 1.442695
        %v725 = vpow.pop %v724
        %v726 = vadd.f32 %v711, 1.0
        %v727 = vadd.f32 %v713, 1.0
        %v728 = vadd.f32 %v715, 1.0
        %v729 = vadd.f32 %v717, 1.0
        %v730 = vadd.f32 %v719, 1.0
        %v731 = vadd.f32 %v721, 1.0
        %v732 = vadd.f32 %v723, 1.0
        %v733 = vadd.f32 %v725, 1.0
        %v734 = vrcp.pop %v726
        %v735 = vmul.f32 %v726, %v734
        %v736 = vsub.f32 1.0, %v735
        %v737 = vmul.f32 %v734, %v736
        %v738 = vadd.f32 %v734, %v737
        %vm739 = vweird.f32 %v726
        %vm740 = vweird.f32 %v734
        %vm741 = vmor %vm739, %vm740
        %v742 = vsel %vm741, %v734, %v738
        %v743 = vand.u32 2147483647, %v726
        %vm744 = vcmp.eq.f32.partialorder %v743, 8.507059e+37
        %v745 = vand.u32 %v726, 2147483648
        %v746 = vor.u32 1.1754944e-38, %v745
        %v747 = vsel %vm744, %v746, %v742
        %v748 = vmul.f32 1.0, %v747
        %v749 = vrcp.pop %v727
        %v750 = vmul.f32 %v727, %v749
        %v751 = vsub.f32 1.0, %v750
        %v752 = vmul.f32 %v749, %v751
        %v753 = vadd.f32 %v749, %v752
        %vm754 = vweird.f32 %v727
        %vm755 = vweird.f32 %v749
        %vm756 = vmor %vm754, %vm755
        %v757 = vsel %vm756, %v749, %v753
        %v758 = vand.u32 2147483647, %v727
        %vm759 = vcmp.eq.f32.partialorder %v758, 8.507059e+37
        %v760 = vand.u32 %v727, 2147483648
        %v761 = vor.u32 1.1754944e-38, %v760
        %v762 = vsel %vm759, %v761, %v757
        %v763 = vmul.f32 1.0, %v762
        %v764 = vrcp.pop %v728
        %v765 = vmul.f32 %v728, %v764
        %v766 = vsub.f32 1.0, %v765
        %v767 = vmul.f32 %v764, %v766
        %v768 = vadd.f32 %v764, %v767
        %vm769 = vweird.f32 %v728
        %vm770 = vweird.f32 %v764
        %vm771 = vmor %vm769, %vm770
        %v772 = vsel %vm771, %v764, %v768
        %v773 = vand.u32 2147483647, %v728
        %vm774 = vcmp.eq.f32.partialorder %v773, 8.507059e+37
        %v775 = vand.u32 %v728, 2147483648
        %v776 = vor.u32 1.1754944e-38, %v775
        %v777 = vsel %vm774, %v776, %v772
        %v778 = vmul.f32 1.0, %v777
        %v779 = vrcp.pop %v729
        %v780 = vmul.f32 %v729, %v779
        %v781 = vsub.f32 1.0, %v780
        %v782 = vmul.f32 %v779, %v781
        %v783 = vadd.f32 %v779, %v782
        %vm784 = vweird.f32 %v729
        %vm785 = vweird.f32 %v779
        %vm786 = vmor %vm784, %vm785
        %v787 = vsel %vm786, %v779, %v783
        %v788 = vand.u32 2147483647, %v729
        %vm789 = vcmp.eq.f32.partialorder %v788, 8.507059e+37
        %v790 = vand.u32 %v729, 2147483648
        %v791 = vor.u32 1.1754944e-38, %v790
        %v792 = vsel %vm789, %v791, %v787
        %v793 = vmul.f32 1.0, %v792
        %v794 = vrcp.pop %v730
        %v795 = vmul.f32 %v730, %v794
        %v796 = vsub.f32 1.0, %v795
        %v797 = vmul.f32 %v794, %v796
        %v798 = vadd.f32 %v794, %v797
        %vm799 = vweird.f32 %v730
        %vm800 = vweird.f32 %v794
        %vm801 = vmor %vm799, %vm800
        %v802 = vsel %vm801, %v794, %v798
        %v803 = vand.u32 2147483647, %v730
        %vm804 = vcmp.eq.f32.partialorder %v803, 8.507059e+37
        %v805 = vand.u32 %v730, 2147483648
        %v806 = vor.u32 1.1754944e-38, %v805
        %v807 = vsel %vm804, %v806, %v802
        %v808 = vmul.f32 1.0, %v807
        %v809 = vrcp.pop %v731
        %v810 = vmul.f32 %v731, %v809
        %v811 = vsub.f32 1.0, %v810
        %v812 = vmul.f32 %v809, %v811
        %v813 = vadd.f32 %v809, %v812
        %vm814 = vweird.f32 %v731
        %vm815 = vweird.f32 %v809
        %vm816 = vmor %vm814, %vm815
        %v817 = vsel %vm816, %v809, %v813
        %v818 = vand.u32 2147483647, %v731
        %vm819 = vcmp.eq.f32.partialorder %v818, 8.507059e+37
        %v820 = vand.u32 %v731, 2147483648
        %v821 = vor.u32 1.1754944e-38, %v820
        %v822 = vsel %vm819, %v821, %v817
        %v823 = vmul.f32 1.0, %v822
        %v824 = vrcp.pop %v732
        %v825 = vmul.f32 %v732, %v824
        %v826 = vsub.f32 1.0, %v825
        %v827 = vmul.f32 %v824, %v826
        %v828 = vadd.f32 %v824, %v827
        %vm829 = vweird.f32 %v732
        %vm830 = vweird.f32 %v824
        %vm831 = vmor %vm829, %vm830
        %v832 = vsel %vm831, %v824, %v828
        %v833 = vand.u32 2147483647, %v732
        %vm834 = vcmp.eq.f32.partialorder %v833, 8.507059e+37
        %v835 = vand.u32 %v732, 2147483648
        %v836 = vor.u32 1.1754944e-38, %v835
        %v837 = vsel %vm834, %v836, %v832
        %v838 = vmul.f32 1.0, %v837
        %v839 = vrcp.pop %v733
        %v840 = vmul.f32 %v733, %v839
        %v841 = vsub.f32 1.0, %v840
        %v842 = vmul.f32 %v839, %v841
        %v843 = vadd.f32 %v839, %v842
        %vm844 = vweird.f32 %v733
        %vm845 = vweird.f32 %v839
        %vm846 = vmor %vm844, %vm845
        %v847 = vsel %vm846, %v839, %v843
        %v848 = vand.u32 2147483647, %v733
        %vm849 = vcmp.eq.f32.partialorder %v848, 8.507059e+37
        %v850 = vand.u32 %v733, 2147483648
        %v851 = vor.u32 1.1754944e-38, %v850
        %v852 = vsel %vm849, %v851, %v847
        %v853 = vmul.f32 1.0, %v852
        %v854 = vmax.f32 %v662, 0.0
        %v855 = vmax.f32 %v663, 0.0
        %v856 = vmax.f32 %v664, 0.0
        %v857 = vmax.f32 %v665, 0.0
        %v858 = vmax.f32 %v666, 0.0
        %v859 = vmax.f32 %v667, 0.0
        %v860 = vmax.f32 %v668, 0.0
        %v861 = vmax.f32 %v669, 0.0
        %v862 = vmax.f32 %v694, 0.0
        %v863 = vmax.f32 %v695, 0.0
        %v864 = vmax.f32 %v696, 0.0
        %v865 = vmax.f32 %v697, 0.0
        %v866 = vmax.f32 %v698, 0.0
        %v867 = vmax.f32 %v699, 0.0
        %v868 = vmax.f32 %v700, 0.0
        %v869 = vmax.f32 %v701, 0.0
        %vm870 = vcmp.ne.f32.partialorder %v662, %v662
        %vm871 = vcmp.ne.f32.partialorder %v663, %v663
        %vm872 = vcmp.ne.f32.partialorder %v664, %v664
        %vm873 = vcmp.ne.f32.partialorder %v665, %v665
        %vm874 = vcmp.ne.f32.partialorder %v666, %v666
        %vm875 = vcmp.ne.f32.partialorder %v667, %v667
        %vm876 = vcmp.ne.f32.partialorder %v668, %v668
        %vm877 = vcmp.ne.f32.partialorder %v669, %v669
        %vm878 = vcmp.ne.f32.partialorder %v694, %v694
        %vm879 = vcmp.ne.f32.partialorder %v695, %v695
        %vm880 = vcmp.ne.f32.partialorder %v696, %v696
        %vm881 = vcmp.ne.f32.partialorder %v697, %v697
        %vm882 = vcmp.ne.f32.partialorder %v698, %v698
        %vm883 = vcmp.ne.f32.partialorder %v699, %v699
        %vm884 = vcmp.ne.f32.partialorder %v700, %v700
        %vm885 = vcmp.ne.f32.partialorder %v701, %v701
        %v886 = vadd.f32 %v662, 0.0
        %v887 = vadd.f32 %v663, 0.0
        %v888 = vadd.f32 %v664, 0.0
        %v889 = vadd.f32 %v665, 0.0
        %v890 = vadd.f32 %v666, 0.0
        %v891 = vadd.f32 %v667, 0.0
        %v892 = vadd.f32 %v668, 0.0
        %v893 = vadd.f32 %v669, 0.0
        %v894 = vadd.f32 %v694, 0.0
        %v895 = vadd.f32 %v695, 0.0
        %v896 = vadd.f32 %v696, 0.0
        %v897 = vadd.f32 %v697, 0.0
        %v898 = vadd.f32 %v698, 0.0
        %v899 = vadd.f32 %v699, 0.0
        %v900 = vadd.f32 %v700, 0.0
        %v901 = vadd.f32 %v701, 0.0
        %v902 = vand.u32 2147483647, %v662
        %v903 = vand.u32 2147483647, %v663
        %v904 = vand.u32 2147483647, %v664
        %v905 = vand.u32 2147483647, %v665
        %v906 = vand.u32 2147483647, %v666
        %v907 = vand.u32 2147483647, %v667
        %v908 = vand.u32 2147483647, %v668
        %v909 = vand.u32 2147483647, %v669
        %v910 = vand.u32 2147483647, %v694
        %v911 = vand.u32 2147483647, %v695
        %v912 = vand.u32 2147483647, %v696
        %v913 = vand.u32 2147483647, %v697
        %v914 = vand.u32 2147483647, %v698
        %v915 = vand.u32 2147483647, %v699
        %v916 = vand.u32 2147483647, %v700
        %v917 = vand.u32 2147483647, %v701
        %v918 = vsub.f32 0.0, %v902
        %v919 = vsub.f32 0.0, %v903
        %v920 = vsub.f32 0.0, %v904
        %v921 = vsub.f32 0.0, %v905
        %v922 = vsub.f32 0.0, %v906
        %v923 = vsub.f32 0.0, %v907
        %v924 = vsub.f32 0.0, %v908
        %v925 = vsub.f32 0.0, %v909
        %v926 = vsub.f32 0.0, %v910
        %v927 = vsub.f32 0.0, %v911
        %v928 = vsub.f32 0.0, %v912
        %v929 = vsub.f32 0.0, %v913
        %v930 = vsub.f32 0.0, %v914
        %v931 = vsub.f32 0.0, %v915
        %v932 = vsub.f32 0.0, %v916
        %v933 = vsub.f32 0.0, %v917
        %v934 = vmul.f32 %v918, 1.442695
        %v935 = vpow.pop %v934
        %v936 = vmul.f32 %v919, 1.442695
        %v937 = vpow.pop %v936
        %v938 = vmul.f32 %v920, 1.442695
        %v939 = vpow.pop %v938
        %v940 = vmul.f32 %v921, 1.442695
        %v941 = vpow.pop %v940
        %v942 = vmul.f32 %v922, 1.442695
        %v943 = vpow.pop %v942
        %v944 = vmul.f32 %v923, 1.442695
        %v945 = vpow.pop %v944
        %v946 = vmul.f32 %v924, 1.442695
        %v947 = vpow.pop %v946
        %v948 = vmul.f32 %v925, 1.442695
        %v949 = vpow.pop %v948
        %v950 = vmul.f32 %v926, 1.442695
        %v951 = vpow.pop %v950
        %v952 = vmul.f32 %v927, 1.442695
        %v953 = vpow.pop %v952
        %v954 = vmul.f32 %v928, 1.442695
        %v955 = vpow.pop %v954
        %v956 = vmul.f32 %v929, 1.442695
        %v957 = vpow.pop %v956
        %v958 = vmul.f32 %v930, 1.442695
        %v959 = vpow.pop %v958
        %v960 = vmul.f32 %v931, 1.442695
        %v961 = vpow.pop %v960
        %v962 = vmul.f32 %v932, 1.442695
        %v963 = vpow.pop %v962
        %v964 = vmul.f32 %v933, 1.442695
        %v965 = vpow.pop %v964
        %v966 = vadd.f32 %v935, 1.0
        %v967 = vlog2.pop %v966
        %v968 = vmul.f32 %v967, 0.6931472
        %v969 = vmul.f32 -0.5, %v935
        %v970 = vadd.f32 %v969, 1.0
        %v971 = vmul.f32 %v970, %v935
        %v972 = vand.u32 2147483647, %v935
        %vm973 = vcmp.lt.f32.partialorder %v972, 0.0004427343
        %v974 = vsel %vm973, %v971, %v968
        %v975 = vadd.f32 %v937, 1.0
        %v976 = vlog2.pop %v975
        %v977 = vmul.f32 %v976, 0.6931472
        %v978 = vmul.f32 -0.5, %v937
        %v979 = vadd.f32 %v978, 1.0
        %v980 = vmul.f32 %v979, %v937
        %v981 = vand.u32 2147483647, %v937
        %vm982 = vcmp.lt.f32.partialorder %v981, 0.0004427343
        %v983 = vsel %vm982, %v980, %v977
        %v984 = vadd.f32 %v939, 1.0
        %v985 = vlog2.pop %v984
        %v986 = vmul.f32 %v985, 0.6931472
        %v987 = vmul.f32 -0.5, %v939
        %v988 = vadd.f32 %v987, 1.0
        %v989 = vmul.f32 %v988, %v939
        %v990 = vand.u32 2147483647, %v939
        %vm991 = vcmp.lt.f32.partialorder %v990, 0.0004427343
        %v992 = vsel %vm991, %v989, %v986
        %v993 = vadd.f32 %v941, 1.0
        %v994 = vlog2.pop %v993
        %v995 = vmul.f32 %v994, 0.6931472
        %v996 = vmul.f32 -0.5, %v941
        %v997 = vadd.f32 %v996, 1.0
        %v998 = vmul.f32 %v997, %v941
        %v999 = vand.u32 2147483647, %v941
        %vm1000 = vcmp.lt.f32.partialorder %v999, 0.0004427343
        %v1001 = vsel %vm1000, %v998, %v995
        %v1002 = vadd.f32 %v943, 1.0
        %v1003 = vlog2.pop %v1002
        %v1004 = vmul.f32 %v1003, 0.6931472
        %v1005 = vmul.f32 -0.5, %v943
        %v1006 = vadd.f32 %v1005, 1.0
        %v1007 = vmul.f32 %v1006, %v943
        %v1008 = vand.u32 2147483647, %v943
        %vm1009 = vcmp.lt.f32.partialorder %v1008, 0.0004427343
        %v1010 = vsel %vm1009, %v1007, %v1004
        %v1011 = vadd.f32 %v945, 1.0
        %v1012 = vlog2.pop %v1011
        %v1013 = vmul.f32 %v1012, 0.6931472
        %v1014 = vmul.f32 -0.5, %v945
        %v1015 = vadd.f32 %v1014, 1.0
        %v1016 = vmul.f32 %v1015, %v945
        %v1017 = vand.u32 2147483647, %v945
        %vm1018 = vcmp.lt.f32.partialorder %v1017, 0.0004427343
        %v1019 = vsel %vm1018, %v1016, %v1013
        %v1020 = vadd.f32 %v947, 1.0
        %v1021 = vlog2.pop %v1020
        %v1022 = vmul.f32 %v1021, 0.6931472
        %v1023 = vmul.f32 -0.5, %v947
        %v1024 = vadd.f32 %v1023, 1.0
        %v1025 = vmul.f32 %v1024, %v947
        %v1026 = vand.u32 2147483647, %v947
        %vm1027 = vcmp.lt.f32.partialorder %v1026, 0.0004427343
        %v1028 = vsel %vm1027, %v1025, %v1022
        %v1029 = vadd.f32 %v949, 1.0
        %v1030 = vlog2.pop %v1029
        %v1031 = vmul.f32 %v1030, 0.6931472
        %v1032 = vmul.f32 -0.5, %v949
        %v1033 = vadd.f32 %v1032, 1.0
        %v1034 = vmul.f32 %v1033, %v949
        %v1035 = vand.u32 2147483647, %v949
        %vm1036 = vcmp.lt.f32.partialorder %v1035, 0.0004427343
        %v1037 = vsel %vm1036, %v1034, %v1031
        %v1038 = vadd.f32 %v951, 1.0
        %v1039 = vlog2.pop %v1038
        %v1040 = vmul.f32 %v1039, 0.6931472
        %v1041 = vmul.f32 -0.5, %v951
        %v1042 = vadd.f32 %v1041, 1.0
        %v1043 = vmul.f32 %v1042, %v951
        %v1044 = vand.u32 2147483647, %v951
        %vm1045 = vcmp.lt.f32.partialorder %v1044, 0.0004427343
        %v1046 = vsel %vm1045, %v1043, %v1040
        %v1047 = vadd.f32 %v953, 1.0
        %v1048 = vlog2.pop %v1047
        %v1049 = vmul.f32 %v1048, 0.6931472
        %v1050 = vmul.f32 -0.5, %v953
        %v1051 = vadd.f32 %v1050, 1.0
        %v1052 = vmul.f32 %v1051, %v953
        %v1053 = vand.u32 2147483647, %v953
        %vm1054 = vcmp.lt.f32.partialorder %v1053, 0.0004427343
        %v1055 = vsel %vm1054, %v1052, %v1049
        %v1056 = vadd.f32 %v955, 1.0
        %v1057 = vlog2.pop %v1056
        %v1058 = vmul.f32 %v1057, 0.6931472
        %v1059 = vmul.f32 -0.5, %v955
        %v1060 = vadd.f32 %v1059, 1.0
        %v1061 = vmul.f32 %v1060, %v955
        %v1062 = vand.u32 2147483647, %v955
        %vm1063 = vcmp.lt.f32.partialorder %v1062, 0.0004427343
        %v1064 = vsel %vm1063, %v1061, %v1058
        %v1065 = vadd.f32 %v957, 1.0
        %v1066 = vlog2.pop %v1065
        %v1067 = vmul.f32 %v1066, 0.6931472
        %v1068 = vmul.f32 -0.5, %v957
        %v1069 = vadd.f32 %v1068, 1.0
        %v1070 = vmul.f32 %v1069, %v957
        %v1071 = vand.u32 2147483647, %v957
        %vm1072 = vcmp.lt.f32.partialorder %v1071, 0.0004427343
        %v1073 = vsel %vm1072, %v1070, %v1067
        %v1074 = vadd.f32 %v959, 1.0
        %v1075 = vlog2.pop %v1074
        %v1076 = vmul.f32 %v1075, 0.6931472
        %v1077 = vmul.f32 -0.5, %v959
        %v1078 = vadd.f32 %v1077, 1.0
        %v1079 = vmul.f32 %v1078, %v959
        %v1080 = vand.u32 2147483647, %v959
        %vm1081 = vcmp.lt.f32.partialorder %v1080, 0.0004427343
        %v1082 = vsel %vm1081, %v1079, %v1076
        %v1083 = vadd.f32 %v961, 1.0
        %v1084 = vlog2.pop %v1083
        %v1085 = vmul.f32 %v1084, 0.6931472
        %v1086 = vmul.f32 -0.5, %v961
        %v1087 = vadd.f32 %v1086, 1.0
        %v1088 = vmul.f32 %v1087, %v961
        %v1089 = vand.u32 2147483647, %v961
        %vm1090 = vcmp.lt.f32.partialorder %v1089, 0.0004427343
        %v1091 = vsel %vm1090, %v1088, %v1085
        %v1092 = vadd.f32 %v963, 1.0
        %v1093 = vlog2.pop %v1092
        %v1094 = vmul.f32 %v1093, 0.6931472
        %v1095 = vmul.f32 -0.5, %v963
        %v1096 = vadd.f32 %v1095, 1.0
        %v1097 = vmul.f32 %v1096, %v963
        %v1098 = vand.u32 2147483647, %v963
        %vm1099 = vcmp.lt.f32.partialorder %v1098, 0.0004427343
        %v1100 = vsel %vm1099, %v1097, %v1094
        %v1101 = vadd.f32 %v965, 1.0
        %v1102 = vlog2.pop %v1101
        %v1103 = vmul.f32 %v1102, 0.6931472
        %v1104 = vmul.f32 -0.5, %v965
        %v1105 = vadd.f32 %v1104, 1.0
        %v1106 = vmul.f32 %v1105, %v965
        %v1107 = vand.u32 2147483647, %v965
        %vm1108 = vcmp.lt.f32.partialorder %v1107, 0.0004427343
        %v1109 = vsel %vm1108, %v1106, %v1103
        %v1110 = vadd.f32 %v854, %v974
        %v1111 = vadd.f32 %v855, %v983
        %v1112 = vadd.f32 %v856, %v992
        %v1113 = vadd.f32 %v857, %v1001
        %v1114 = vadd.f32 %v858, %v1010
        %v1115 = vadd.f32 %v859, %v1019
        %v1116 = vadd.f32 %v860, %v1028
        %v1117 = vadd.f32 %v861, %v1037
        %v1118 = vadd.f32 %v862, %v1046
        %v1119 = vadd.f32 %v863, %v1055
        %v1120 = vadd.f32 %v864, %v1064
        %v1121 = vadd.f32 %v865, %v1073
        %v1122 = vadd.f32 %v866, %v1082
        %v1123 = vadd.f32 %v867, %v1091
        %v1124 = vadd.f32 %v868, %v1100
        %v1125 = vadd.f32 %v869, %v1109
        %v1126 = vsel %vm870, %v886, %v1110
        %v1127 = vsel %vm871, %v887, %v1111
        %v1128 = vsel %vm872, %v888, %v1112
        %v1129 = vsel %vm873, %v889, %v1113
        %v1130 = vsel %vm874, %v890, %v1114
        %v1131 = vsel %vm875, %v891, %v1115
        %v1132 = vsel %vm876, %v892, %v1116
        %v1133 = vsel %vm877, %v893, %v1117
        %v1134 = vsel %vm878, %v894, %v1118
        %v1135 = vsel %vm879, %v895, %v1119
        %v1136 = vsel %vm880, %v896, %v1120
        %v1137 = vsel %vm881, %v897, %v1121
        %v1138 = vsel %vm882, %v898, %v1122
        %v1139 = vsel %vm883, %v899, %v1123
        %v1140 = vsel %vm884, %v900, %v1124
        %v1141 = vsel %vm885, %v901, %v1125
        %v1150 = vrot.slane %v748, 4
        %v1151 = vrot.slane %v763, 4
        %v1152 = vrot.slane %v778, 4
        %v1153 = vrot.slane %v793, 4
        %v1154 = vrot.slane %v808, 4
        %v1155 = vrot.slane %v823, 4
        %v1156 = vrot.slane %v838, 4
        %v1157 = vrot.slane %v853, 4
        %v1166 = vsub.f32 %v748, %v1150
        %v1167 = vsub.f32 %v763, %v1151
        %v1168 = vsub.f32 %v778, %v1152
        %v1169 = vsub.f32 %v793, %v1153
        %v1170 = vsub.f32 %v808, %v1154
        %v1171 = vsub.f32 %v823, %v1155
        %v1172 = vsub.f32 %v838, %v1156
        %v1173 = vsub.f32 %v853, %v1157
        %v1174 = vsub.f32 %v662, %v1126
        %v1175 = vsub.f32 %v663, %v1127
        %v1176 = vsub.f32 %v664, %v1128
        %v1177 = vsub.f32 %v665, %v1129
        %v1178 = vsub.f32 %v666, %v1130
        %v1179 = vsub.f32 %v667, %v1131
        %v1180 = vsub.f32 %v668, %v1132
        %v1181 = vsub.f32 %v669, %v1133
        %v1182 = vsub.f32 0.0, %v1126
        %v1183 = vsub.f32 0.0, %v1127
        %v1184 = vsub.f32 0.0, %v1128
        %v1185 = vsub.f32 0.0, %v1129
        %v1186 = vsub.f32 0.0, %v1130
        %v1187 = vsub.f32 0.0, %v1131
        %v1188 = vsub.f32 0.0, %v1132
        %v1189 = vsub.f32 0.0, %v1133
        %v1190 = vsub.f32 %v694, %v348
        %v1191 = vsub.f32 %v695, %v349
        %v1192 = vsub.f32 %v696, %v350
        %v1193 = vsub.f32 %v697, %v351
        %v1194 = vsub.f32 %v698, %v352
        %v1195 = vsub.f32 %v699, %v353
        %v1196 = vsub.f32 %v700, %v354
        %v1197 = vsub.f32 %v701, %v355
        %v1198 = vmul.f32 %v1134, 2.0
        %v1199 = vmul.f32 %v1135, 2.0
        %v1200 = vmul.f32 %v1136, 2.0
        %v1201 = vmul.f32 %v1137, 2.0
        %v1202 = vmul.f32 %v1138, 2.0
        %v1203 = vmul.f32 %v1139, 2.0
        %v1204 = vmul.f32 %v1140, 2.0
        %v1205 = vmul.f32 %v1141, 2.0
        %v1206 = vsub.f32 %v1190, %v1198
        %v1207 = vsub.f32 %v1191, %v1199
        %v1208 = vsub.f32 %v1192, %v1200
        %v1209 = vsub.f32 %v1193, %v1201
        %v1210 = vsub.f32 %v1194, %v1202
        %v1211 = vsub.f32 %v1195, %v1203
        %v1212 = vsub.f32 %v1196, %v1204
        %v1213 = vsub.f32 %v1197, %v1205
        %vm1214 = vcmp.eq.f32.partialorder %v532, -1.0
        %vm1215 = vcmp.eq.f32.partialorder %v532, 1.0
        %vm1216 = vcmp.gt.f32.partialorder %v1166, 1e-05
        %vm1217 = vcmp.gt.f32.partialorder %v1167, 1e-05
        %vm1218 = vcmp.gt.f32.partialorder %v1168, 1e-05
        %vm1219 = vcmp.gt.f32.partialorder %v1169, 1e-05
        %vm1220 = vcmp.gt.f32.partialorder %v1170, 1e-05
        %vm1221 = vcmp.gt.f32.partialorder %v1171, 1e-05
        %vm1222 = vcmp.gt.f32.partialorder %v1172, 1e-05
        %vm1223 = vcmp.gt.f32.partialorder %v1173, 1e-05
        %v1224 = vmax.f32 %v1166, 1e-12
        %v1225 = vmax.f32 %v1167, 1e-12
        %v1226 = vmax.f32 %v1168, 1e-12
        %v1227 = vmax.f32 %v1169, 1e-12
        %v1228 = vmax.f32 %v1170, 1e-12
        %v1229 = vmax.f32 %v1171, 1e-12
        %v1230 = vmax.f32 %v1172, 1e-12
        %v1231 = vmax.f32 %v1173, 1e-12
        %v1232 = vlog2.pop %v1224
        %v1233 = vmul.f32 %v1232, 0.6931472
        %v1234 = vlog2.pop %v1225
        %v1235 = vmul.f32 %v1234, 0.6931472
        %v1236 = vlog2.pop %v1226
        %v1237 = vmul.f32 %v1236, 0.6931472
        %v1238 = vlog2.pop %v1227
        %v1239 = vmul.f32 %v1238, 0.6931472
        %v1240 = vlog2.pop %v1228
        %v1241 = vmul.f32 %v1240, 0.6931472
        %v1242 = vlog2.pop %v1229
        %v1243 = vmul.f32 %v1242, 0.6931472
        %v1244 = vlog2.pop %v1230
        %v1245 = vmul.f32 %v1244, 0.6931472
        %v1246 = vlog2.pop %v1231
        %v1247 = vmul.f32 %v1246, 0.6931472
        %v1248 = vsub.f32 %v1206, 4.8520303
        %v1249 = vsub.f32 %v1207, 4.8520303
        %v1250 = vsub.f32 %v1208, 4.8520303
        %v1251 = vsub.f32 %v1209, 4.8520303
        %v1252 = vsub.f32 %v1210, 4.8520303
        %v1253 = vsub.f32 %v1211, 4.8520303
        %v1254 = vsub.f32 %v1212, 4.8520303
        %v1255 = vsub.f32 %v1213, 4.8520303
        %v1256 = vsel %vm1216, %v1233, %v1248
        %v1257 = vsel %vm1217, %v1235, %v1249
        %v1258 = vsel %vm1218, %v1237, %v1250
        %v1259 = vsel %vm1219, %v1239, %v1251
        %v1260 = vsel %vm1220, %v1241, %v1252
        %v1261 = vsel %vm1221, %v1243, %v1253
        %v1262 = vsel %vm1222, %v1245, %v1254
        %v1263 = vsel %vm1223, %v1247, %v1255
        %v1264 = vsel %vm1215, 1, 0
        %v1265 = vperm.slane %v1264, 0
        %v1266 = vperm.slane %v1264, 1
        %v1267 = vperm.slane %v1264, 2
        %v1268 = vperm.slane %v1264, 3
        %v1269 = vperm.slane %v1264, 4
        %v1270 = vperm.slane %v1264, 5
        %v1271 = vperm.slane %v1264, 6
        %v1272 = vperm.slane %v1264, 7
        %vm1273 = vcmp.eq.s32.totalorder %v1265, 1
        %vm1274 = vcmp.eq.s32.totalorder %v1266, 1
        %vm1275 = vcmp.eq.s32.totalorder %v1267, 1
        %vm1276 = vcmp.eq.s32.totalorder %v1268, 1
        %vm1277 = vcmp.eq.s32.totalorder %v1269, 1
        %vm1278 = vcmp.eq.s32.totalorder %v1270, 1
        %vm1279 = vcmp.eq.s32.totalorder %v1271, 1
        %vm1280 = vcmp.eq.s32.totalorder %v1272, 1
        %v1289 = vrot.slane %v1256, 4
        %v1290 = vrot.slane %v1257, 4
        %v1291 = vrot.slane %v1258, 4
        %v1292 = vrot.slane %v1259, 4
        %v1293 = vrot.slane %v1260, 4
        %v1294 = vrot.slane %v1261, 4
        %v1295 = vrot.slane %v1262, 4
        %v1296 = vrot.slane %v1263, 4
        %v1305 = vsel %vm1273, %v1182, %v1289
        %v1306 = vsel %vm1274, %v1183, %v1290
        %v1307 = vsel %vm1275, %v1184, %v1291
        %v1308 = vsel %vm1276, %v1185, %v1292
        %v1309 = vsel %vm1277, %v1186, %v1293
        %v1310 = vsel %vm1278, %v1187, %v1294
        %v1311 = vsel %vm1279, %v1188, %v1295
        %v1312 = vsel %vm1280, %v1189, %v1296
        %v1313 = vsel %vm1214, 1, 0
        %v1314 = vperm.slane %v1313, 0
        %v1315 = vperm.slane %v1313, 1
        %v1316 = vperm.slane %v1313, 2
        %v1317 = vperm.slane %v1313, 3
        %v1318 = vperm.slane %v1313, 4
        %v1319 = vperm.slane %v1313, 5
        %v1320 = vperm.slane %v1313, 6
        %v1321 = vperm.slane %v1313, 7
        %vm1322 = vcmp.eq.s32.totalorder %v1314, 1
        %vm1323 = vcmp.eq.s32.totalorder %v1315, 1
        %vm1324 = vcmp.eq.s32.totalorder %v1316, 1
        %vm1325 = vcmp.eq.s32.totalorder %v1317, 1
        %vm1326 = vcmp.eq.s32.totalorder %v1318, 1
        %vm1327 = vcmp.eq.s32.totalorder %v1319, 1
        %vm1328 = vcmp.eq.s32.totalorder %v1320, 1
        %vm1329 = vcmp.eq.s32.totalorder %v1321, 1
        %v1338 = vrot.slane %v1305, 4
        %v1339 = vrot.slane %v1306, 4
        %v1340 = vrot.slane %v1307, 4
        %v1341 = vrot.slane %v1308, 4
        %v1342 = vrot.slane %v1309, 4
        %v1343 = vrot.slane %v1310, 4
        %v1344 = vrot.slane %v1311, 4
        %v1345 = vrot.slane %v1312, 4
        %v1354 = vsel %vm1322, %v1174, %v1338
        %v1355 = vsel %vm1323, %v1175, %v1339
        %v1356 = vsel %vm1324, %v1176, %v1340
        %v1357 = vsel %vm1325, %v1177, %v1341
        %v1358 = vsel %vm1326, %v1178, %v1342
        %v1359 = vsel %vm1327, %v1179, %v1343
        %v1360 = vsel %vm1328, %v1180, %v1344
        %v1361 = vsel %vm1329, %v1181, %v1345
        %v1362 = vadd.f32 %v524, %v1354
        %v1363 = vadd.f32 %v525, %v1355
        %v1364 = vadd.f32 %v526, %v1356
        %v1365 = vadd.f32 %v527, %v1357
        %v1366 = vadd.f32 %v528, %v1358
        %v1367 = vadd.f32 %v529, %v1359
        %v1368 = vadd.f32 %v530, %v1360
        %v1369 = vadd.f32 %v531, %v1361
        %v1378 = vrot.slane %v267, 4
        %v1379 = vrot.slane %v268, 4
        %v1380 = vrot.slane %v269, 4
        %v1381 = vrot.slane %v270, 4
        %v1382 = vrot.slane %v271, 4
        %v1383 = vrot.slane %v272, 4
        %v1384 = vrot.slane %v273, 4
        %v1385 = vrot.slane %v274, 4
        %v1394 = vmul.f32 %v332, %v1378
        %v1395 = vmul.f32 %v333, %v1379
        %v1396 = vmul.f32 %v334, %v1380
        %v1397 = vmul.f32 %v335, %v1381
        %v1398 = vmul.f32 %v336, %v1382
        %v1399 = vmul.f32 %v337, %v1383
        %v1400 = vmul.f32 %v338, %v1384
        %v1401 = vmul.f32 %v339, %v1385
        %v1410 = vrot.slane %v1394, 4
        %v1411 = vrot.slane %v1395, 4
        %v1412 = vrot.slane %v1396, 4
        %v1413 = vrot.slane %v1397, 4
        %v1414 = vrot.slane %v1398, 4
        %v1415 = vrot.slane %v1399, 4
        %v1416 = vrot.slane %v1400, 4
        %v1417 = vrot.slane %v1401, 4
        %v1426 = vsel %vm275, %v1410, 0.0
        %v1427 = vrot.slane %v1426, 4
        %v1428 = vadd.f32 %v1426, %v1427
        %v1429 = vrot.slane %v1428, 2
        %v1430 = vadd.f32 %v1428, %v1429
        %v1431 = vrot.slane %v1430, 1
        %v1432 = vadd.f32 %v1430, %v1431
        %v1433 = vsel %vm275, %v1411, 0.0
        %v1434 = vrot.slane %v1433, 4
        %v1435 = vadd.f32 %v1433, %v1434
        %v1436 = vrot.slane %v1435, 2
        %v1437 = vadd.f32 %v1435, %v1436
        %v1438 = vrot.slane %v1437, 1
        %v1439 = vadd.f32 %v1437, %v1438
        %v1440 = vsel %vm275, %v1412, 0.0
        %v1441 = vrot.slane %v1440, 4
        %v1442 = vadd.f32 %v1440, %v1441
        %v1443 = vrot.slane %v1442, 2
        %v1444 = vadd.f32 %v1442, %v1443
        %v1445 = vrot.slane %v1444, 1
        %v1446 = vadd.f32 %v1444, %v1445
        %v1447 = vsel %vm275, %v1413, 0.0
        %v1448 = vrot.slane %v1447, 4
        %v1449 = vadd.f32 %v1447, %v1448
        %v1450 = vrot.slane %v1449, 2
        %v1451 = vadd.f32 %v1449, %v1450
        %v1452 = vrot.slane %v1451, 1
        %v1453 = vadd.f32 %v1451, %v1452
        %v1454 = vsel %vm275, %v1414, 0.0
        %v1455 = vrot.slane %v1454, 4
        %v1456 = vadd.f32 %v1454, %v1455
        %v1457 = vrot.slane %v1456, 2
        %v1458 = vadd.f32 %v1456, %v1457
        %v1459 = vrot.slane %v1458, 1
        %v1460 = vadd.f32 %v1458, %v1459
        %v1461 = vsel %vm275, %v1415, 0.0
        %v1462 = vrot.slane %v1461, 4
        %v1463 = vadd.f32 %v1461, %v1462
        %v1464 = vrot.slane %v1463, 2
        %v1465 = vadd.f32 %v1463, %v1464
        %v1466 = vrot.slane %v1465, 1
        %v1467 = vadd.f32 %v1465, %v1466
        %v1468 = vsel %vm275, %v1416, 0.0
        %v1469 = vrot.slane %v1468, 4
        %v1470 = vadd.f32 %v1468, %v1469
        %v1471 = vrot.slane %v1470, 2
        %v1472 = vadd.f32 %v1470, %v1471
        %v1473 = vrot.slane %v1472, 1
        %v1474 = vadd.f32 %v1472, %v1473
        %v1475 = vsel %vm275, %v1417, 0.0
        %v1476 = vrot.slane %v1475, 4
        %v1477 = vadd.f32 %v1475, %v1476
        %v1478 = vrot.slane %v1477, 2
        %v1479 = vadd.f32 %v1477, %v1478
        %v1480 = vrot.slane %v1479, 1
        %v1481 = vadd.f32 %v1479, %v1480
        %v1490 = vrot.slane %v1439, 7
        %v1491 = vrot.slane %v1446, 6
        %v1492 = vrot.slane %v1453, 5
        %v1493 = vrot.slane %v1460, 4
        %v1494 = vrot.slane %v1467, 3
        %v1495 = vrot.slane %v1474, 2
        %v1496 = vrot.slane %v1481, 1
        %vm1497 = vcmask 1040384
        %v1498 = vsel %vm1497, %v1432, %v1490
        %vm1499 = vcmask 1042434
        %v1500 = vsel %vm1499, %v1491, %v1492
        %vm1501 = vcmask 1041408
        %v1502 = vsel %vm1501, %v1498, %v1500
        %vm1503 = vcmask 1044484
        %v1504 = vsel %vm1503, %v1493, %v1494
        %vm1505 = vcmask 1046534
        %v1506 = vsel %vm1505, %v1495, %v1496
        %vm1507 = vcmask 1045508
        %v1508 = vsel %vm1507, %v1504, %v1506
        %v1509 = vsel %vm275, %v1502, %v1508
        %1511 = vst [vmem:[%s263] sm:$0xff] %v1509
        %v1512 = vsel %vm275, %v1362, -inf
        %v1513 = vrot.slane %v1512, 4
        %v1514 = vmax.f32 %v1512, %v1513
        %v1515 = vrot.slane %v1514, 2
        %v1516 = vmax.f32 %v1514, %v1515
        %v1517 = vrot.slane %v1516, 1
        %v1518 = vmax.f32 %v1516, %v1517
        %v1519 = vsel %vm275, %v1363, -inf
        %v1520 = vrot.slane %v1519, 4
        %v1521 = vmax.f32 %v1519, %v1520
        %v1522 = vrot.slane %v1521, 2
        %v1523 = vmax.f32 %v1521, %v1522
        %v1524 = vrot.slane %v1523, 1
        %v1525 = vmax.f32 %v1523, %v1524
        %v1526 = vsel %vm275, %v1364, -inf
        %v1527 = vrot.slane %v1526, 4
        %v1528 = vmax.f32 %v1526, %v1527
        %v1529 = vrot.slane %v1528, 2
        %v1530 = vmax.f32 %v1528, %v1529
        %v1531 = vrot.slane %v1530, 1
        %v1532 = vmax.f32 %v1530, %v1531
        %v1533 = vsel %vm275, %v1365, -inf
        %v1534 = vrot.slane %v1533, 4
        %v1535 = vmax.f32 %v1533, %v1534
        %v1536 = vrot.slane %v1535, 2
        %v1537 = vmax.f32 %v1535, %v1536
        %v1538 = vrot.slane %v1537, 1
        %v1539 = vmax.f32 %v1537, %v1538
        %v1540 = vsel %vm275, %v1366, -inf
        %v1541 = vrot.slane %v1540, 4
        %v1542 = vmax.f32 %v1540, %v1541
        %v1543 = vrot.slane %v1542, 2
        %v1544 = vmax.f32 %v1542, %v1543
        %v1545 = vrot.slane %v1544, 1
        %v1546 = vmax.f32 %v1544, %v1545
        %v1547 = vsel %vm275, %v1367, -inf
        %v1548 = vrot.slane %v1547, 4
        %v1549 = vmax.f32 %v1547, %v1548
        %v1550 = vrot.slane %v1549, 2
        %v1551 = vmax.f32 %v1549, %v1550
        %v1552 = vrot.slane %v1551, 1
        %v1553 = vmax.f32 %v1551, %v1552
        %v1554 = vsel %vm275, %v1368, -inf
        %v1555 = vrot.slane %v1554, 4
        %v1556 = vmax.f32 %v1554, %v1555
        %v1557 = vrot.slane %v1556, 2
        %v1558 = vmax.f32 %v1556, %v1557
        %v1559 = vrot.slane %v1558, 1
        %v1560 = vmax.f32 %v1558, %v1559
        %v1561 = vsel %vm275, %v1369, -inf
        %v1562 = vrot.slane %v1561, 4
        %v1563 = vmax.f32 %v1561, %v1562
        %v1564 = vrot.slane %v1563, 2
        %v1565 = vmax.f32 %v1563, %v1564
        %v1566 = vrot.slane %v1565, 1
        %v1567 = vmax.f32 %v1565, %v1566
        %v1568 = vsub.f32 %v1362, %v1518
        %v1569 = vsub.f32 %v1363, %v1525
        %v1570 = vsub.f32 %v1364, %v1532
        %v1571 = vsub.f32 %v1365, %v1539
        %v1572 = vsub.f32 %v1366, %v1546
        %v1573 = vsub.f32 %v1367, %v1553
        %v1574 = vsub.f32 %v1368, %v1560
        %v1575 = vsub.f32 %v1369, %v1567
        %v1576 = vmul.f32 %v1568, 1.442695
        %v1577 = vpow.pop %v1576
        %v1578 = vmul.f32 %v1569, 1.442695
        %v1579 = vpow.pop %v1578
        %v1580 = vmul.f32 %v1570, 1.442695
        %v1581 = vpow.pop %v1580
        %v1582 = vmul.f32 %v1571, 1.442695
        %v1583 = vpow.pop %v1582
        %v1584 = vmul.f32 %v1572, 1.442695
        %v1585 = vpow.pop %v1584
        %v1586 = vmul.f32 %v1573, 1.442695
        %v1587 = vpow.pop %v1586
        %v1588 = vmul.f32 %v1574, 1.442695
        %v1589 = vpow.pop %v1588
        %v1590 = vmul.f32 %v1575, 1.442695
        %v1591 = vpow.pop %v1590
        %v1592 = vsel %vm275, %v1577, 0.0
        %v1593 = vrot.slane %v1592, 4
        %v1594 = vadd.f32 %v1592, %v1593
        %v1595 = vrot.slane %v1594, 2
        %v1596 = vadd.f32 %v1594, %v1595
        %v1597 = vrot.slane %v1596, 1
        %v1598 = vadd.f32 %v1596, %v1597
        %v1599 = vsel %vm275, %v1579, 0.0
        %v1600 = vrot.slane %v1599, 4
        %v1601 = vadd.f32 %v1599, %v1600
        %v1602 = vrot.slane %v1601, 2
        %v1603 = vadd.f32 %v1601, %v1602
        %v1604 = vrot.slane %v1603, 1
        %v1605 = vadd.f32 %v1603, %v1604
        %v1606 = vsel %vm275, %v1581, 0.0
        %v1607 = vrot.slane %v1606, 4
        %v1608 = vadd.f32 %v1606, %v1607
        %v1609 = vrot.slane %v1608, 2
        %v1610 = vadd.f32 %v1608, %v1609
        %v1611 = vrot.slane %v1610, 1
        %v1612 = vadd.f32 %v1610, %v1611
        %v1613 = vsel %vm275, %v1583, 0.0
        %v1614 = vrot.slane %v1613, 4
        %v1615 = vadd.f32 %v1613, %v1614
        %v1616 = vrot.slane %v1615, 2
        %v1617 = vadd.f32 %v1615, %v1616
        %v1618 = vrot.slane %v1617, 1
        %v1619 = vadd.f32 %v1617, %v1618
        %v1620 = vsel %vm275, %v1585, 0.0
        %v1621 = vrot.slane %v1620, 4
        %v1622 = vadd.f32 %v1620, %v1621
        %v1623 = vrot.slane %v1622, 2
        %v1624 = vadd.f32 %v1622, %v1623
        %v1625 = vrot.slane %v1624, 1
        %v1626 = vadd.f32 %v1624, %v1625
        %v1627 = vsel %vm275, %v1587, 0.0
        %v1628 = vrot.slane %v1627, 4
        %v1629 = vadd.f32 %v1627, %v1628
        %v1630 = vrot.slane %v1629, 2
        %v1631 = vadd.f32 %v1629, %v1630
        %v1632 = vrot.slane %v1631, 1
        %v1633 = vadd.f32 %v1631, %v1632
        %v1634 = vsel %vm275, %v1589, 0.0
        %v1635 = vrot.slane %v1634, 4
        %v1636 = vadd.f32 %v1634, %v1635
        %v1637 = vrot.slane %v1636, 2
        %v1638 = vadd.f32 %v1636, %v1637
        %v1639 = vrot.slane %v1638, 1
        %v1640 = vadd.f32 %v1638, %v1639
        %v1641 = vsel %vm275, %v1591, 0.0
        %v1642 = vrot.slane %v1641, 4
        %v1643 = vadd.f32 %v1641, %v1642
        %v1644 = vrot.slane %v1643, 2
        %v1645 = vadd.f32 %v1643, %v1644
        %v1646 = vrot.slane %v1645, 1
        %v1647 = vadd.f32 %v1645, %v1646
        %v1648 = vlog2.pop %v1598
        %v1649 = vmul.f32 %v1648, 0.6931472
        %v1650 = vlog2.pop %v1605
        %v1651 = vmul.f32 %v1650, 0.6931472
        %v1652 = vlog2.pop %v1612
        %v1653 = vmul.f32 %v1652, 0.6931472
        %v1654 = vlog2.pop %v1619
        %v1655 = vmul.f32 %v1654, 0.6931472
        %v1656 = vlog2.pop %v1626
        %v1657 = vmul.f32 %v1656, 0.6931472
        %v1658 = vlog2.pop %v1633
        %v1659 = vmul.f32 %v1658, 0.6931472
        %v1660 = vlog2.pop %v1640
        %v1661 = vmul.f32 %v1660, 0.6931472
        %v1662 = vlog2.pop %v1647
        %v1663 = vmul.f32 %v1662, 0.6931472
        %v1664 = vadd.f32 %v1518, %v1649
        %v1665 = vadd.f32 %v1525, %v1651
        %v1666 = vadd.f32 %v1532, %v1653
        %v1667 = vadd.f32 %v1539, %v1655
        %v1668 = vadd.f32 %v1546, %v1657
        %v1669 = vadd.f32 %v1553, %v1659
        %v1670 = vadd.f32 %v1560, %v1661
        %v1671 = vadd.f32 %v1567, %v1663
        %v1672 = vsub.f32 0.0, %v1664
        %v1673 = vsub.f32 0.0, %v1665
        %v1674 = vsub.f32 0.0, %v1666
        %v1675 = vsub.f32 0.0, %v1667
        %v1676 = vsub.f32 0.0, %v1668
        %v1677 = vsub.f32 0.0, %v1669
        %v1678 = vsub.f32 0.0, %v1670
        %v1679 = vsub.f32 0.0, %v1671
        %v1680 = vadd.f32 %v1672, %v1673
        %v1681 = vadd.f32 %v1680, %v1674
        %v1682 = vadd.f32 %v1681, %v1675
        %v1683 = vadd.f32 %v1682, %v1676
        %v1684 = vadd.f32 %v1683, %v1677
        %v1685 = vadd.f32 %v1684, %v1678
        %v1686 = vadd.f32 %v1685, %v1679
        %1687 = vst [vmem:[%s256] sm:$0x1] %v1686
        %s1688 = sand.u32 %s105, 1
        %s1689 = scalar_lea.sflag [#allocation4], %s1688
        %s1690 = sand.u32 %s105, 1
        %s1691 = scalar_lea.vmem [#allocation7], %s1690
        %s1692 = sand.u32 %s133, 1
        %s1693 = scalar_lea.sflag [#allocation9], %s1692
        %s1694 = sand.u32 %s133, 1
        %s1695 = smul.addr %s1694, 8
        %s1696 = scalar_lea.vmem [#allocation8], %s1695
        // Predicated region
        $region37: #{tpu_custom_call.1} parent=27 // pred_check
          %p1697 = pneg %p115
        $region38: #{tpu_custom_call.1} parent=27 // pred_check_branch
          %1699 = sbr.rel (%p1697) target = $region40
        $region39: #{tpu_custom_call.1} parent=27 // pred_region
          %1701 = vsyncadd %s1689, 0
          %s1702 = smul.addr %s31, 2
          %s1703 = sadd.s32 %s32, %s1702
          %s1704 = scalar_lea.hbm %s2, %s1703
          %s1706 = sshll.u32 %s1691, 4
          %s1707 = int_to_ptr.vmem [resolvable:$true] %s1706
          %s1708 = sshll.u32 %s1704, 4
          %s1709 = int_to_ptr.hbm [resolvable:$true] %s1708
          %1711 = dma.vmem_to_hbm [thread:$0]  %s1707, 16, %s1709, %s1689
        $region40: #{tpu_custom_call.1} parent=27 // pred_fallthru
          _
        // Predicated region
        $region41: #{tpu_custom_call.1} parent=27 // pred_check
          %p1712 = pneg %p143
        $region42: #{tpu_custom_call.1} parent=27 // pred_check_branch
          %1714 = sbr.rel (%p1712) target = $region44
        $region43: #{tpu_custom_call.1} parent=27 // pred_region
          %s1715 = smul.u32 8, %s32
          %1717 = vsyncadd %s1693, 0
          %s1718 = smul.addr %s31, 16
          %s1719 = sadd.s32 %s1715, %s1718
          %s1720 = scalar_lea.hbm %s3, %s1719
          %s1722 = sshll.u32 %s1696, 4
          %s1723 = int_to_ptr.vmem [resolvable:$true] %s1722
          %s1724 = sshll.u32 %s1720, 4
          %s1725 = int_to_ptr.hbm [resolvable:$true] %s1724
          %1727 = dma.vmem_to_hbm [thread:$0]  %s1723, 128, %s1725, %s1693
        $region44: #{tpu_custom_call.1} parent=27 // pred_fallthru
          _
      $region28: #{tpu_custom_call.1} parent=5 // pred_fallthru
        _
      %p1728 = scmp.le.s32.totalorder 2, %s22
      // Predicated region
      $region45: #{tpu_custom_call.1} parent=5 // pred_check
        %p1729 = pneg %p1728
      $region46: #{tpu_custom_call.1} parent=5 // pred_check_branch
        %1731 = sbr.rel (%p1729) target = $region48
      $region47: #{tpu_custom_call.1} parent=5 // pred_region
        %s1732 = ssub.s32 %s22, 2
        // Predicated region
        $region49: #{tpu_custom_call.1} parent=47 // pred_check
          %p1733 = pneg %p121
        $region50: #{tpu_custom_call.1} parent=47 // pred_check_branch
          %1735 = sbr.rel (%p1733) target = $region52
        $region51: #{tpu_custom_call.1} parent=47 // pred_region
          %s1736 = sand.u32 %s106, 1
          %s1737 = scalar_lea.sflag [#allocation4], %s1736
          %s1738 = sand.u32 %s106, 1
          %s1739 = scalar_lea.vmem [#allocation7], %s1738
          %1741 = dma.done %s1737, 16
        $region52: #{tpu_custom_call.1} parent=47 // pred_fallthru
          _
        // Predicated region
        $region53: #{tpu_custom_call.1} parent=47 // pred_check
          %p1742 = pneg %p149
        $region54: #{tpu_custom_call.1} parent=47 // pred_check_branch
          %1744 = sbr.rel (%p1742) target = $region56
        $region55: #{tpu_custom_call.1} parent=47 // pred_region
          %s1745 = sand.u32 %s134, 1
          %s1746 = scalar_lea.sflag [#allocation9], %s1745
          %s1747 = sand.u32 %s134, 1
          %s1748 = smul.addr %s1747, 8
          %s1749 = scalar_lea.vmem [#allocation8], %s1748
          %1751 = dma.done %s1746, 128
        $region56: #{tpu_custom_call.1} parent=47 // pred_fallthru
          _
      $region48: #{tpu_custom_call.1} parent=5 // pred_fallthru
        _
    $region6: #{tpu_custom_call.1} parent=1 // loop_footer
      %s26 = sadd.s32 1, %s22
    $region7: #{tpu_custom_call.1} parent=1 // loop_footer_branch
      %21 = sbr.rel target = $region3
    $region8: #{tpu_custom_call.1} parent=1 // loop_exit
      _
    %1752 = vsyncpa [#allocation3], 1
    %s1753 = scalar_lea.sflag [#allocation3], 1
    %1754 = vsyncpa %s1753, 1
    %1755 = vsyncpa [#allocation6], 1
    %s1756 = scalar_lea.sflag [#allocation6], 1
    %1757 = vsyncpa %s1756, 1
    %1758 = vsyncpa [#allocation4], 1
    %s1759 = scalar_lea.sflag [#allocation4], 1
    %1760 = vsyncpa %s1759, 1
    %1761 = vsyncpa [#allocation9], 1
    %s1762 = scalar_lea.sflag [#allocation9], 1
    %1763 = vsyncpa %s1762, 1

</llo_original>
